<compile_context>
chip_gen: v7x
topology: tpu7x:2x2x1
jax: 0.10.0
libtpu: 0.0.40
codegen_flags: <defaults>
</compile_context>

<pallas_src>
import jax
import jax.numpy as jnp
from jax.experimental import pallas as pl
from jax.experimental.pallas import tpu as pltpu

LEAK = 0.1  # LeakyReLU slope used by the PyTorch module (nn.LeakyReLU(0.1))


# ---------------------------------------------------------------------------
# Kernel
# ---------------------------------------------------------------------------
def fsda_kernel(re_ref, im_ref,                 # (1, C, HW) data tiles
                cw_ref, cb_ref,                 # (2, 2C, 2C), (2, 2C, 1)
                f1w_ref, f1b_ref,               # (2Cr, 2C), (2Cr, 1)
                f2w_ref, f2b_ref,               # (2C, 2Cr), (2C, 1)
                real_ref, imag_ref):            # (1, C, HW) outputs
    re = re_ref[0]                              # (C, HW)
    im = im_ref[0]                              # (C, HW)
    C = re.shape[0]

    # Fused torch.abs / torch.angle
    mag = jnp.sqrt(re * re + im * im)
    pha = jnp.arctan2(im, re)

    # Stack the two branches on the sublane axis: rows [0:C]=mag, [C:2C]=pha.
    x = jnp.concatenate([mag, pha], axis=0)     # (2C, HW)

    w1 = cw_ref[0]                              # block-diag conv1 weight (2C, 2C)
    w2 = cw_ref[1]                              # block-diag conv2 weight (2C, 2C)
    b1 = cb_ref[0]                              # (2C, 1)
    b2 = cb_ref[1]                              # (2C, 1)

    # 1x1 conv (both branches in one MXU push) + LeakyReLU(0.1)
    t = jnp.dot(w1, x, preferred_element_type=jnp.float32) + b1
    t = jnp.where(t >= 0.0, t, LEAK * t)

    # SE layer: global average pool over the spatial (lane) axis,
    # two tiny fc layers, sigmoid gate broadcast back over lanes.
    sq = jnp.mean(t, axis=-1, keepdims=True)                                  # (2C, 1)
    h = jnp.dot(f1w_ref[...], sq, preferred_element_type=jnp.float32) + f1b_ref[...]
    h = jnp.maximum(h, 0.0)                                                   # ReLU
    g = jnp.dot(f2w_ref[...], h, preferred_element_type=jnp.float32) + f2b_ref[...]
    g = jax.nn.sigmoid(g)                                                     # (2C, 1)
    t = t * g

    # second 1x1 conv + residual
    y = x + jnp.dot(w2, t, preferred_element_type=jnp.float32) + b2           # (2C, HW)

    mag_p = y[:C]
    pha_p = y[C:]
    real_ref[0] = mag_p * jnp.cos(pha_p)
    imag_ref[0] = mag_p * jnp.sin(pha_p)


# ---------------------------------------------------------------------------
# Parameters (PyTorch orientation: Conv2d 1x1 weight = (Cout, Cin),
# Linear weight = (out, in)) + packing into consolidated slabs.
# ---------------------------------------------------------------------------
def init_params(key, nc, reduction_ratio=8):
    ncr = max(nc // reduction_ratio, 1)
    ks = jax.random.split(key, 16)
    scale = 0.2

    def w(k, shape):
        return (scale * jax.random.normal(k, shape)).astype(jnp.float32)

    params = {}
    for i, pre in enumerate(("m", "p")):
        o = i * 8
        params[f"{pre}_w1"] = w(ks[o + 0], (nc, nc))    # conv1 (Cout, Cin)
        params[f"{pre}_b1"] = w(ks[o + 1], (nc,))
        params[f"{pre}_wf1"] = w(ks[o + 2], (ncr, nc))  # SE fc1 (out, in)
        params[f"{pre}_bf1"] = w(ks[o + 3], (ncr,))
        params[f"{pre}_wf2"] = w(ks[o + 4], (nc, ncr))  # SE fc2 (out, in)
        params[f"{pre}_bf2"] = w(ks[o + 5], (nc,))
        params[f"{pre}_w2"] = w(ks[o + 6], (nc, nc))    # conv2 (Cout, Cin)
        params[f"{pre}_b2"] = w(ks[o + 7], (nc,))
    return params


def _block_diag(a, b):
    top = jnp.concatenate([a, jnp.zeros((a.shape[0], b.shape[1]), a.dtype)], axis=1)
    bot = jnp.concatenate([jnp.zeros((b.shape[0], a.shape[1]), b.dtype), b], axis=1)
    return jnp.concatenate([top, bot], axis=0)


def pack_params(params):
    """16 per-branch tensors -> 6 consolidated slabs (mag/pha block-diag fused)."""
    conv_w = jnp.stack([_block_diag(params["m_w1"], params["p_w1"]),
                        _block_diag(params["m_w2"], params["p_w2"])], axis=0)   # (2, 2C, 2C)
    conv_b = jnp.stack([jnp.concatenate([params["m_b1"], params["p_b1"]])[:, None],
                        jnp.concatenate([params["m_b2"], params["p_b2"]])[:, None]],
                       axis=0)                                                  # (2, 2C, 1)
    f1_w = _block_diag(params["m_wf1"], params["p_wf1"])                        # (2Cr, 2C)
    f1_b = jnp.concatenate([params["m_bf1"], params["p_bf1"]])[:, None]         # (2Cr, 1)
    f2_w = _block_diag(params["m_wf2"], params["p_wf2"])                        # (2C, 2Cr)
    f2_b = jnp.concatenate([params["m_bf2"], params["p_bf2"]])[:, None]         # (2C, 1)
    return (conv_w, conv_b, f1_w, f1_b, f2_w, f2_b)


# ---------------------------------------------------------------------------
# Wrapper
# ---------------------------------------------------------------------------
def fsda_forward(x_complex, packed_params):
    B, C, H, W = x_complex.shape
    HW = H * W

    # Native NCHW -> (B, C, HW): pure reshape, no transpose / extra HBM pass.
    re = jnp.real(x_complex).astype(jnp.float32).reshape(B, C, HW)
    im = jnp.imag(x_complex).astype(jnp.float32).reshape(B, C, HW)

    data_spec = pl.BlockSpec((1, C, HW), lambda b: (b, 0, 0))

    def param_spec(p):
        return pl.BlockSpec(p.shape, lambda b, _nd=p.ndim: (0,) * _nd)

    in_specs = [data_spec, data_spec] + [param_spec(p) for p in packed_params]
    out_specs = [data_spec, data_spec]
    out_shape = [jax.ShapeDtypeStruct((B, C, HW), jnp.float32),
                 jax.ShapeDtypeStruct((B, C, HW), jnp.float32)]

    # Advisory cost estimate: two (2C,2C)x(2C,HW) matmuls per batch element,
    # ~4 transcendentals per element (atan2, cos, sin, sqrt), 4 array passes.
    flops = int(B * (4 * (2 * C) ** 2 * HW + 12 * C * HW))
    transcendentals = int(4 * B * C * HW)
    bytes_accessed = int(4 * 4 * B * C * HW + sum(int(p.size) * 4 for p in packed_params))

    real, imag = pl.pallas_call(
        fsda_kernel,
        grid=(B,),
        in_specs=in_specs,
        out_specs=out_specs,
        out_shape=out_shape,
        compiler_params=pltpu.CompilerParams(
            dimension_semantics=("parallel",)),
        cost_estimate=pl.CostEstimate(
            flops=flops,
            transcendentals=transcendentals,
            bytes_accessed=bytes_accessed),
    )(re, im, *packed_params)

    return jax.lax.complex(real, imag).reshape(B, C, H, W)


# ---------------------------------------------------------------------------
# Pure-JAX reference mirroring the PyTorch module (per-branch, unfused).
# ---------------------------------------------------------------------------
def fsda_reference(x_complex, params):
    B, C, H, W = x_complex.shape
    HW = H * W
    mag = jnp.abs(x_complex).astype(jnp.float32).reshape(B, C, HW)
    pha = jnp.angle(x_complex).astype(jnp.float32).reshape(B, C, HW)

    def branch(v, pre):
        t = jnp.einsum("oc,bcs->bos", params[f"{pre}_w1"], v) \
            + params[f"{pre}_b1"][None, :, None]
        t = jnp.where(t >= 0, t, LEAK * t)
        sq = jnp.mean(t, axis=2)                                        # (B, C)
        h = jax.nn.relu(sq @ params[f"{pre}_wf1"].T + params[f"{pre}_bf1"])
        g = jax.nn.sigmoid(h @ params[f"{pre}_wf2"].T + params[f"{pre}_bf2"])
        t = t * g[:, :, None]
        out = jnp.einsum("oc,bcs->bos", params[f"{pre}_w2"], t) \
            + params[f"{pre}_b2"][None, :, None]
        return v + out

    mag_p = branch(mag, "m")
    pha_p = branch(pha, "p")
    out = jax.lax.complex(mag_p * jnp.cos(pha_p), mag_p * jnp.sin(pha_p))
    return out.reshape(B, C, H, W)


if __name__ == "__main__":
    B, C, H, W = 2, 8, 16, 16       # nc=8 -> SE reduced channels = 1

    key = jax.random.PRNGKey(0)
    k_re, k_im, k_par = jax.random.split(key, 3)
    x_re = jax.random.normal(k_re, (B, C, H, W), dtype=jnp.float32)
    x_im = jax.random.normal(k_im, (B, C, H, W), dtype=jnp.float32)
    x = jax.lax.complex(x_re, x_im)

    params = init_params(k_par, C)
    packed = pack_params(params)

    out = jax.block_until_ready(fsda_forward(x, packed))
    ref = jax.block_until_ready(fsda_reference(x, params))

    assert out.shape == (B, C, H, W) and out.dtype == jnp.complex64
    assert jnp.allclose(out.real, ref.real, atol=2e-3, rtol=2e-3)
    assert jnp.allclose(out.imag, ref.imag, atol=2e-3, rtol=2e-3)

    print("KERNEL_OK")
</pallas_src>

<mosaic_0001>
module attributes {stable_mosaic.version = 11 : i64} {
  func.func @fsda_kernel(%arg0: i32, %arg1: memref<1x8x256xf32, #tpu.memory_space<vmem>>, %arg2: memref<1x8x256xf32, #tpu.memory_space<vmem>>, %arg3: memref<2x16x16xf32, #tpu.memory_space<vmem>>, %arg4: memref<2x16x1xf32, #tpu.memory_space<vmem>>, %arg5: memref<2x16xf32, #tpu.memory_space<vmem>>, %arg6: memref<2x1xf32, #tpu.memory_space<vmem>>, %arg7: memref<16x2xf32, #tpu.memory_space<vmem>>, %arg8: memref<16x1xf32, #tpu.memory_space<vmem>>, %arg9: memref<1x8x256xf32, #tpu.memory_space<vmem>>, %arg10: memref<1x8x256xf32, #tpu.memory_space<vmem>>) attributes {dimension_semantics = [#tpu.dimension_semantics<parallel>], iteration_bounds = array<i64: 2>, scalar_prefetch = 0 : i64, scratch_operands = 0 : i64, tpu.core_type = #tpu.core_type<tc>, window_params = [{transform_indices = @transform_0, window_bounds = array<i64: 1, 8, 256>}, {transform_indices = @transform_1, window_bounds = array<i64: 1, 8, 256>}, {pipeline_mode = #tpu.pipeline_mode<synchronous>, transform_indices = @transform_2, window_bounds = array<i64: 2, 16, 16>}, {pipeline_mode = #tpu.pipeline_mode<synchronous>, transform_indices = @transform_3, window_bounds = array<i64: 2, 16, 1>}, {pipeline_mode = #tpu.pipeline_mode<synchronous>, transform_indices = @transform_4, window_bounds = array<i64: 2, 16>}, {pipeline_mode = #tpu.pipeline_mode<synchronous>, transform_indices = @transform_5, window_bounds = array<i64: 2, 1>}, {pipeline_mode = #tpu.pipeline_mode<synchronous>, transform_indices = @transform_6, window_bounds = array<i64: 16, 2>}, {pipeline_mode = #tpu.pipeline_mode<synchronous>, transform_indices = @transform_7, window_bounds = array<i64: 16, 1>}, {transform_indices = @transform_8, window_bounds = array<i64: 1, 8, 256>}, {transform_indices = @transform_9, window_bounds = array<i64: 1, 8, 256>}]} {
    %c0 = arith.constant 0 : index
    %c0_0 = arith.constant 0 : index
    %c0_1 = arith.constant 0 : index
    %0 = vector.load %arg1[%c0, %c0_0, %c0_1] : memref<1x8x256xf32, #tpu.memory_space<vmem>>, vector<1x8x256xf32>
    %1 = vector.shape_cast %0 : vector<1x8x256xf32> to vector<8x256xf32>
    %c0_2 = arith.constant 0 : index
    %c0_3 = arith.constant 0 : index
    %c0_4 = arith.constant 0 : index
    %2 = vector.load %arg2[%c0_2, %c0_3, %c0_4] : memref<1x8x256xf32, #tpu.memory_space<vmem>>, vector<1x8x256xf32>
    %3 = vector.shape_cast %2 : vector<1x8x256xf32> to vector<8x256xf32>
    %4 = arith.mulf %1, %1 : vector<8x256xf32>
    %5 = arith.mulf %3, %3 : vector<8x256xf32>
    %6 = arith.addf %4, %5 : vector<8x256xf32>
    %7 = math.sqrt %6 : vector<8x256xf32>
    %8 = math.atan2 %3, %1 : vector<8x256xf32>
    %9 = tpu.concatenate %7, %8 in 0 : vector<8x256xf32>, vector<8x256xf32> -> vector<16x256xf32>
    %c0_5 = arith.constant 0 : index
    %c0_6 = arith.constant 0 : index
    %c0_7 = arith.constant 0 : index
    %10 = vector.load %arg3[%c0_5, %c0_6, %c0_7] : memref<2x16x16xf32, #tpu.memory_space<vmem>>, vector<1x16x16xf32>
    %11 = vector.shape_cast %10 : vector<1x16x16xf32> to vector<16x16xf32>
    %c1 = arith.constant 1 : index
    %c0_8 = arith.constant 0 : index
    %c0_9 = arith.constant 0 : index
    %12 = vector.load %arg3[%c1, %c0_8, %c0_9] : memref<2x16x16xf32, #tpu.memory_space<vmem>>, vector<1x16x16xf32>
    %13 = vector.shape_cast %12 : vector<1x16x16xf32> to vector<16x16xf32>
    %c0_10 = arith.constant 0 : index
    %c0_11 = arith.constant 0 : index
    %c0_12 = arith.constant 0 : index
    %14 = vector.load %arg4[%c0_10, %c0_11, %c0_12] : memref<2x16x1xf32, #tpu.memory_space<vmem>>, vector<1x16x1xf32>
    %15 = vector.shape_cast %14 : vector<1x16x1xf32> to vector<16x1xf32>
    %c1_13 = arith.constant 1 : index
    %c0_14 = arith.constant 0 : index
    %c0_15 = arith.constant 0 : index
    %16 = vector.load %arg4[%c1_13, %c0_14, %c0_15] : memref<2x16x1xf32, #tpu.memory_space<vmem>>, vector<1x16x1xf32>
    %17 = vector.shape_cast %16 : vector<1x16x1xf32> to vector<16x1xf32>
    %cst = arith.constant dense<0.000000e+00> : vector<16x256xf32>
    %18 = tpu.matmul %11, %9, %cst {dimension_numbers = #tpu.dot_dimension_numbers<[1], [0], [0], [1], [0, 0, 1, 1], [], []>} : vector<16x16xf32>, vector<16x256xf32>, vector<16x256xf32> -> vector<16x256xf32>
    %19 = vector.broadcast %15 : vector<16x1xf32> to vector<16x256xf32>
    %20 = arith.addf %18, %19 : vector<16x256xf32>
    %cst_16 = arith.constant 0.000000e+00 : f32
    %21 = vector.broadcast %cst_16 : f32 to vector<16x256xf32>
    %22 = arith.cmpf oge, %20, %21 : vector<16x256xf32>
    %cst_17 = arith.constant 1.000000e-01 : f32
    %23 = vector.broadcast %cst_17 : f32 to vector<16x256xf32>
    %24 = arith.mulf %23, %20 : vector<16x256xf32>
    %25 = arith.select %22, %20, %24 : vector<16x256xi1>, vector<16x256xf32>
    %cst_18 = arith.constant dense<0.000000e+00> : vector<16xf32>
    %26 = vector.multi_reduction <add>, %25, %cst_18 [1] : vector<16x256xf32> to vector<16xf32>
    %27 = vector.shape_cast %26 : vector<16xf32> to vector<16x1xf32>
    %cst_19 = arith.constant 2.560000e+02 : f32
    %28 = vector.broadcast %cst_19 : f32 to vector<16x1xf32>
    %29 = arith.divf %27, %28 : vector<16x1xf32>
    %c0_20 = arith.constant 0 : index
    %c0_21 = arith.constant 0 : index
    %30 = vector.load %arg5[%c0_20, %c0_21] : memref<2x16xf32, #tpu.memory_space<vmem>>, vector<2x16xf32>
    %cst_22 = arith.constant dense<0.000000e+00> : vector<2x1xf32>
    %31 = tpu.matmul %30, %29, %cst_22 {dimension_numbers = #tpu.dot_dimension_numbers<[1], [0], [0], [1], [0, 0, 1, 1], [], []>} : vector<2x16xf32>, vector<16x1xf32>, vector<2x1xf32> -> vector<2x1xf32>
    %c0_23 = arith.constant 0 : index
    %c0_24 = arith.constant 0 : index
    %32 = vector.load %arg6[%c0_23, %c0_24] : memref<2x1xf32, #tpu.memory_space<vmem>>, vector<2x1xf32>
    %33 = arith.addf %31, %32 : vector<2x1xf32>
    %cst_25 = arith.constant 0.000000e+00 : f32
    %34 = vector.broadcast %cst_25 : f32 to vector<2x1xf32>
    %35 = arith.maximumf %33, %34 : vector<2x1xf32>
    %c0_26 = arith.constant 0 : index
    %c0_27 = arith.constant 0 : index
    %36 = vector.load %arg7[%c0_26, %c0_27] : memref<16x2xf32, #tpu.memory_space<vmem>>, vector<16x2xf32>
    %cst_28 = arith.constant dense<0.000000e+00> : vector<16x1xf32>
    %37 = tpu.matmul %36, %35, %cst_28 {dimension_numbers = #tpu.dot_dimension_numbers<[1], [0], [0], [1], [0, 0, 1, 1], [], []>} : vector<16x2xf32>, vector<2x1xf32>, vector<16x1xf32> -> vector<16x1xf32>
    %c0_29 = arith.constant 0 : index
    %c0_30 = arith.constant 0 : index
    %38 = vector.load %arg8[%c0_29, %c0_30] : memref<16x1xf32, #tpu.memory_space<vmem>>, vector<16x1xf32>
    %39 = arith.addf %37, %38 : vector<16x1xf32>
    %40 = arith.negf %39 : vector<16x1xf32>
    %41 = math.exp %40 : vector<16x1xf32>
    %cst_31 = arith.constant 1.000000e+00 : f32
    %42 = vector.broadcast %cst_31 : f32 to vector<16x1xf32>
    %43 = arith.addf %42, %41 : vector<16x1xf32>
    %44 = arith.divf %42, %43 : vector<16x1xf32>
    %45 = vector.broadcast %44 : vector<16x1xf32> to vector<16x256xf32>
    %46 = arith.mulf %25, %45 : vector<16x256xf32>
    %cst_32 = arith.constant dense<0.000000e+00> : vector<16x256xf32>
    %47 = tpu.matmul %13, %46, %cst_32 {dimension_numbers = #tpu.dot_dimension_numbers<[1], [0], [0], [1], [0, 0, 1, 1], [], []>} : vector<16x16xf32>, vector<16x256xf32>, vector<16x256xf32> -> vector<16x256xf32>
    %48 = arith.addf %9, %47 : vector<16x256xf32>
    %49 = vector.broadcast %17 : vector<16x1xf32> to vector<16x256xf32>
    %50 = arith.addf %48, %49 : vector<16x256xf32>
    %51 = vector.extract_strided_slice %50 {offsets = [0, 0], sizes = [8, 256], strides = [1, 1]} : vector<16x256xf32> to vector<8x256xf32>
    %52 = vector.extract_strided_slice %50 {offsets = [8, 0], sizes = [8, 256], strides = [1, 1]} : vector<16x256xf32> to vector<8x256xf32>
    %53 = math.cos %52 : vector<8x256xf32>
    %54 = arith.mulf %51, %53 : vector<8x256xf32>
    %c0_33 = arith.constant 0 : index
    %c0_34 = arith.constant 0 : index
    %c0_35 = arith.constant 0 : index
    %55 = vector.load %arg9[%c0_33, %c0_34, %c0_35] : memref<1x8x256xf32, #tpu.memory_space<vmem>>, vector<1x8x256xf32>
    %56 = vector.shape_cast %55 : vector<1x8x256xf32> to vector<8x256xf32>
    %57 = vector.shape_cast %54 : vector<8x256xf32> to vector<1x8x256xf32>
    tpu.vector_store %arg9[%c0_33, %c0_34, %c0_35], %57 {strides = array<i32>} : memref<1x8x256xf32, #tpu.memory_space<vmem>>, vector<1x8x256xf32>,
    %58 = math.sin %52 : vector<8x256xf32>
    %59 = arith.mulf %51, %58 : vector<8x256xf32>
    %c0_36 = arith.constant 0 : index
    %c0_37 = arith.constant 0 : index
    %c0_38 = arith.constant 0 : index
    %60 = vector.load %arg10[%c0_36, %c0_37, %c0_38] : memref<1x8x256xf32, #tpu.memory_space<vmem>>, vector<1x8x256xf32>
    %61 = vector.shape_cast %60 : vector<1x8x256xf32> to vector<8x256xf32>
    %62 = vector.shape_cast %59 : vector<8x256xf32> to vector<1x8x256xf32>
    tpu.vector_store %arg10[%c0_36, %c0_37, %c0_38], %62 {strides = array<i32>} : memref<1x8x256xf32, #tpu.memory_space<vmem>>, vector<1x8x256xf32>,
    return
  }
  func.func @transform_0(%arg0: i32) -> (i32, i32, i32) {
    %c0_i32 = arith.constant 0 : i32
    %c0_i32_0 = arith.constant 0 : i32
    %c0_i32_1 = arith.constant 0 : i32
    return %arg0, %c0_i32, %c0_i32_0 : i32, i32, i32
  }
  func.func @transform_1(%arg0: i32) -> (i32, i32, i32) {
    %c0_i32 = arith.constant 0 : i32
    %c0_i32_0 = arith.constant 0 : i32
    %c0_i32_1 = arith.constant 0 : i32
    return %arg0, %c0_i32, %c0_i32_0 : i32, i32, i32
  }
  func.func @transform_2(%arg0: i32) -> (i32, i32, i32) {
    %c0_i32 = arith.constant 0 : i32
    %c0_i32_0 = arith.constant 0 : i32
    %c0_i32_1 = arith.constant 0 : i32
    %c0_i32_2 = arith.constant 0 : i32
    return %c0_i32, %c0_i32_0, %c0_i32_1 : i32, i32, i32
  }
  func.func @transform_3(%arg0: i32) -> (i32, i32, i32) {
    %c0_i32 = arith.constant 0 : i32
    %c0_i32_0 = arith.constant 0 : i32
    %c0_i32_1 = arith.constant 0 : i32
    %c0_i32_2 = arith.constant 0 : i32
    return %c0_i32, %c0_i32_0, %c0_i32_1 : i32, i32, i32
  }
  func.func @transform_4(%arg0: i32) -> (i32, i32) {
    %c0_i32 = arith.constant 0 : i32
    %c0_i32_0 = arith.constant 0 : i32
    %c0_i32_1 = arith.constant 0 : i32
    return %c0_i32, %c0_i32_0 : i32, i32
  }
  func.func @transform_5(%arg0: i32) -> (i32, i32) {
    %c0_i32 = arith.constant 0 : i32
    %c0_i32_0 = arith.constant 0 : i32
    %c0_i32_1 = arith.constant 0 : i32
    return %c0_i32, %c0_i32_0 : i32, i32
  }
  func.func @transform_6(%arg0: i32) -> (i32, i32) {
    %c0_i32 = arith.constant 0 : i32
    %c0_i32_0 = arith.constant 0 : i32
    %c0_i32_1 = arith.constant 0 : i32
    return %c0_i32, %c0_i32_0 : i32, i32
  }
  func.func @transform_7(%arg0: i32) -> (i32, i32) {
    %c0_i32 = arith.constant 0 : i32
    %c0_i32_0 = arith.constant 0 : i32
    %c0_i32_1 = arith.constant 0 : i32
    return %c0_i32, %c0_i32_0 : i32, i32
  }
  func.func @transform_8(%arg0: i32) -> (i32, i32, i32) {
    %c0_i32 = arith.constant 0 : i32
    %c0_i32_0 = arith.constant 0 : i32
    %c0_i32_1 = arith.constant 0 : i32
    return %arg0, %c0_i32, %c0_i32_0 : i32, i32, i32
  }
  func.func @transform_9(%arg0: i32) -> (i32, i32, i32) {
    %c0_i32 = arith.constant 0 : i32
    %c0_i32_0 = arith.constant 0 : i32
    %c0_i32_1 = arith.constant 0 : i32
    return %arg0, %c0_i32, %c0_i32_0 : i32, i32, i32
  }
}

</mosaic_0001>

<llo_original>
// kernel: tpu_custom_call.1
$region0: #{tpu_custom_call.1}
  #allocation0 [shape = 'u32[]', space=smem, size = 0x4, offset = 0x4, fixed_abs, tag = 'smem constant byte address 0x4 - core index']
  #allocation1 [shape = 'u32[144,128]{1,0:T(1,128)}', space=vmem, size = 0x12000, scoped, tag = 'internal scratch']
  %s0 = inlined_call_operand.vmem [shape: f32[2,8,256], index: 0, kind: input, shape index: {}]
  %s1 = inlined_call_operand.vmem [shape: f32[2,8,256], index: 1, kind: input, shape index: {}]
  %s2 = inlined_call_operand.hbm [shape: f32[2,16,16], index: 2, kind: input, shape index: {}]
  %s3 = inlined_call_operand.vmem [shape: f32[2,16,1], index: 3, kind: input, shape index: {}]
  %s4 = inlined_call_operand.vmem [shape: f32[2,16], index: 4, kind: input, shape index: {}]
  %s5 = inlined_call_operand.vmem [shape: f32[2,1], index: 5, kind: input, shape index: {}]
  %s6 = inlined_call_operand.vmem [shape: f32[16,2], index: 6, kind: input, shape index: {}]
  %s7 = inlined_call_operand.vmem [shape: f32[16,1], index: 7, kind: input, shape index: {}]
  %s8 = inlined_call_operand.hbm [shape: f32[2,8,256], index: 8, kind: output, shape index: {0}]
  %s9 = inlined_call_operand.hbm [shape: f32[2,8,256], index: 9, kind: output, shape index: {1}]
  %10 = xla_tuple %s8, %s9
  %s11 = sld [smem:[#allocation0]]
  $region77: #{tpu_custom_call.1} parent=0
    _
  %s13 = ssub.s32 1, %s11
  %s14 = scalar_select 0, %s13, %s11
  $region1: #{tpu_custom_call.1} parent=0
    #allocation2 [shape = 'u8[16384]{0}', space=vmem, size = 0x4000, scoped, tag = 'input window, operand 2, single buffered']
    #allocation3 [shape = 's32[2]{0}', space=sflag, size = 0x8, scoped, tag = 'scoped memory for tpu_custom_call.1']
    #allocation4 [shape = 's32[2]{0}', space=sflag, size = 0x8, scoped, tag = 'scoped memory for tpu_custom_call.1']
    #allocation5 [shape = 'u8[16384]{0}', space=vmem, size = 0x4000, scoped, tag = 'output window, operand 0']
    #allocation6 [shape = 'u8[16384]{0}', space=vmem, size = 0x4000, scoped, tag = 'output window, operand 1']
    #allocation7 [shape = 's32[2]{0}', space=sflag, size = 0x8, scoped, tag = 'scoped memory for tpu_custom_call.1']
    %15 = vsyncpa [#allocation3], 0
    %16 = vsyncpa [#allocation4], 0
    %s17 = scalar_lea.sflag [#allocation4], 1
    %18 = vsyncpa %s17, 0
    %19 = vsyncpa [#allocation7], 0
    %s20 = scalar_lea.sflag [#allocation7], 1
    %21 = vsyncpa %s20, 0
    loop: start=0, step=1, limit=4
    $region2: #{tpu_custom_call.1} parent=1 // loop_pre_header
      _
    $region3: #{tpu_custom_call.1} parent=1 // loop_header
      %s23 = sphi 0, %s27
      %p24 = scmp.ge.s32.totalorder %s23, 4
      %s33 = sphi 0, %s35
      %s36 = sphi 0, %s33
      %s37 = sphi 0, %s36
      %s53 = sphi 0, %s37
      %s59 = sphi 0, %s61
      %s62 = sphi 0, %s59
      %s63 = sphi 0, %s62
      %s79 = sphi 0, %s63
      %s83 = sphi 0, %s83
      %s85 = sphi 0, %s83
      %s86 = sphi 0, %s85
      %s100 = sphi 0, %s86
      %s104 = sphi 0, %s104
      %s106 = sphi 0, %s104
      %s107 = sphi 0, %s106
      %s121 = sphi 0, %s107
      %s125 = sphi 0, %s125
      %s127 = sphi 0, %s125
      %s128 = sphi 0, %s127
      %s142 = sphi 0, %s128
      %s146 = sphi 0, %s146
      %s148 = sphi 0, %s146
      %s149 = sphi 0, %s148
      %s163 = sphi 0, %s149
      %s167 = sphi 0, %s167
      %s169 = sphi 0, %s167
      %s170 = sphi 0, %s169
      %s184 = sphi 0, %s170
      %s188 = sphi 0, %s188
      %s190 = sphi 0, %s188
      %s191 = sphi 0, %s190
      %s205 = sphi 0, %s191
      %s211 = sphi 0, %s213
      %s214 = sphi 0, %s211
      %s215 = sphi 0, %s214
      %s231 = sphi 0, %s215
      %s237 = sphi 0, %s239
      %s240 = sphi 0, %s237
      %s241 = sphi 0, %s240
      %s257 = sphi 0, %s241
    $region4: #{tpu_custom_call.1} parent=1 // loop_header_branch
      %26 = sbr.rel (%p24) target = $region8
    $region5: #{tpu_custom_call.1} parent=1 // loop_body
      %s28 = ssub.s32 %s23, 1
      %s29 = ssub.s32 %s23, 2
      %s30 = sadd.s32 %s23, 1
      %s31 = ssub.s32 %s23, %s30
      %p32 = scmp.eq.s32.totalorder %s31, 0
      %s34 = sadd.s32 %s33, 1
      %s35 = scalar_select %p32, %s33, %s34
      %p38 = pneg %p32
      %p39 = scmp.eq.s32.totalorder %s23, 1
      %p40 = por %p38, %p39
      %p41 = scmp.ne.s32.totalorder %s33, %s36
      %p42 = scmp.eq.s32.totalorder %s23, 0
      %p43 = por %p41, %p42
      %p44 = scmp.ne.s32.totalorder %s33, %s36
      %p45 = scmp.eq.s32.totalorder %s28, 1
      %p46 = por %p44, %p45
      %p47 = scmp.ne.s32.totalorder %s36, %s37
      %p48 = scmp.eq.s32.totalorder %s28, 0
      %p49 = por %p47, %p48
      %p50 = scmp.ne.s32.totalorder %s36, %s37
      %p51 = scmp.eq.s32.totalorder %s29, 1
      %p52 = por %p50, %p51
      %p54 = scmp.ne.s32.totalorder %s37, %s53
      %p55 = scmp.eq.s32.totalorder %s29, 0
      %p56 = por %p54, %p55
      %s57 = ssub.s32 %s23, %s30
      %p58 = scmp.eq.s32.totalorder %s57, 0
      %s60 = sadd.s32 %s59, 1
      %s61 = scalar_select %p58, %s59, %s60
      %p64 = pneg %p58
      %p65 = scmp.eq.s32.totalorder %s23, 1
      %p66 = por %p64, %p65
      %p67 = scmp.ne.s32.totalorder %s59, %s62
      %p68 = scmp.eq.s32.totalorder %s23, 0
      %p69 = por %p67, %p68
      %p70 = scmp.ne.s32.totalorder %s59, %s62
      %p71 = scmp.eq.s32.totalorder %s28, 1
      %p72 = por %p70, %p71
      %p73 = scmp.ne.s32.totalorder %s62, %s63
      %p74 = scmp.eq.s32.totalorder %s28, 0
      %p75 = por %p73, %p74
      %p76 = scmp.ne.s32.totalorder %s62, %s63
      %p77 = scmp.eq.s32.totalorder %s29, 1
      %p78 = por %p76, %p77
      %p80 = scmp.ne.s32.totalorder %s63, %s79
      %p81 = scmp.eq.s32.totalorder %s29, 0
      %p82 = por %p80, %p81
      %s84 = sadd.s32 %s83, 1
      %p87 = scmp.eq.s32.totalorder %s23, 1
      %p88 = scmp.ne.s32.totalorder %s83, %s85
      %p89 = scmp.eq.s32.totalorder %s23, 0
      %p90 = por %p88, %p89
      %p91 = scmp.ne.s32.totalorder %s83, %s85
      %p92 = scmp.eq.s32.totalorder %s28, 1
      %p93 = por %p91, %p92
      %p94 = scmp.ne.s32.totalorder %s85, %s86
      %p95 = scmp.eq.s32.totalorder %s28, 0
      %p96 = por %p94, %p95
      %p97 = scmp.ne.s32.totalorder %s85, %s86
      %p98 = scmp.eq.s32.totalorder %s29, 1
      %p99 = por %p97, %p98
      %p101 = scmp.ne.s32.totalorder %s86, %s100
      %p102 = scmp.eq.s32.totalorder %s29, 0
      %p103 = por %p101, %p102
      %s105 = sadd.s32 %s104, 1
      %p108 = scmp.eq.s32.totalorder %s23, 1
      %p109 = scmp.ne.s32.totalorder %s104, %s106
      %p110 = scmp.eq.s32.totalorder %s23, 0
      %p111 = por %p109, %p110
      %p112 = scmp.ne.s32.totalorder %s104, %s106
      %p113 = scmp.eq.s32.totalorder %s28, 1
      %p114 = por %p112, %p113
      %p115 = scmp.ne.s32.totalorder %s106, %s107
      %p116 = scmp.eq.s32.totalorder %s28, 0
      %p117 = por %p115, %p116
      %p118 = scmp.ne.s32.totalorder %s106, %s107
      %p119 = scmp.eq.s32.totalorder %s29, 1
      %p120 = por %p118, %p119
      %p122 = scmp.ne.s32.totalorder %s107, %s121
      %p123 = scmp.eq.s32.totalorder %s29, 0
      %p124 = por %p122, %p123
      %s126 = sadd.s32 %s125, 1
      %p129 = scmp.eq.s32.totalorder %s23, 1
      %p130 = scmp.ne.s32.totalorder %s125, %s127
      %p131 = scmp.eq.s32.totalorder %s23, 0
      %p132 = por %p130, %p131
      %p133 = scmp.ne.s32.totalorder %s125, %s127
      %p134 = scmp.eq.s32.totalorder %s28, 1
      %p135 = por %p133, %p134
      %p136 = scmp.ne.s32.totalorder %s127, %s128
      %p137 = scmp.eq.s32.totalorder %s28, 0
      %p138 = por %p136, %p137
      %p139 = scmp.ne.s32.totalorder %s127, %s128
      %p140 = scmp.eq.s32.totalorder %s29, 1
      %p141 = por %p139, %p140
      %p143 = scmp.ne.s32.totalorder %s128, %s142
      %p144 = scmp.eq.s32.totalorder %s29, 0
      %p145 = por %p143, %p144
      %s147 = sadd.s32 %s146, 1
      %p150 = scmp.eq.s32.totalorder %s23, 1
      %p151 = scmp.ne.s32.totalorder %s146, %s148
      %p152 = scmp.eq.s32.totalorder %s23, 0
      %p153 = por %p151, %p152
      %p154 = scmp.ne.s32.totalorder %s146, %s148
      %p155 = scmp.eq.s32.totalorder %s28, 1
      %p156 = por %p154, %p155
      %p157 = scmp.ne.s32.totalorder %s148, %s149
      %p158 = scmp.eq.s32.totalorder %s28, 0
      %p159 = por %p157, %p158
      %p160 = scmp.ne.s32.totalorder %s148, %s149
      %p161 = scmp.eq.s32.totalorder %s29, 1
      %p162 = por %p160, %p161
      %p164 = scmp.ne.s32.totalorder %s149, %s163
      %p165 = scmp.eq.s32.totalorder %s29, 0
      %p166 = por %p164, %p165
      %s168 = sadd.s32 %s167, 1
      %p171 = scmp.eq.s32.totalorder %s23, 1
      %p172 = scmp.ne.s32.totalorder %s167, %s169
      %p173 = scmp.eq.s32.totalorder %s23, 0
      %p174 = por %p172, %p173
      %p175 = scmp.ne.s32.totalorder %s167, %s169
      %p176 = scmp.eq.s32.totalorder %s28, 1
      %p177 = por %p175, %p176
      %p178 = scmp.ne.s32.totalorder %s169, %s170
      %p179 = scmp.eq.s32.totalorder %s28, 0
      %p180 = por %p178, %p179
      %p181 = scmp.ne.s32.totalorder %s169, %s170
      %p182 = scmp.eq.s32.totalorder %s29, 1
      %p183 = por %p181, %p182
      %p185 = scmp.ne.s32.totalorder %s170, %s184
      %p186 = scmp.eq.s32.totalorder %s29, 0
      %p187 = por %p185, %p186
      %s189 = sadd.s32 %s188, 1
      %p192 = scmp.eq.s32.totalorder %s23, 1
      %p193 = scmp.ne.s32.totalorder %s188, %s190
      %p194 = scmp.eq.s32.totalorder %s23, 0
      %p195 = por %p193, %p194
      %p196 = scmp.ne.s32.totalorder %s188, %s190
      %p197 = scmp.eq.s32.totalorder %s28, 1
      %p198 = por %p196, %p197
      %p199 = scmp.ne.s32.totalorder %s190, %s191
      %p200 = scmp.eq.s32.totalorder %s28, 0
      %p201 = por %p199, %p200
      %p202 = scmp.ne.s32.totalorder %s190, %s191
      %p203 = scmp.eq.s32.totalorder %s29, 1
      %p204 = por %p202, %p203
      %p206 = scmp.ne.s32.totalorder %s191, %s205
      %p207 = scmp.eq.s32.totalorder %s29, 0
      %p208 = por %p206, %p207
      %s209 = ssub.s32 %s23, %s30
      %p210 = scmp.eq.s32.totalorder %s209, 0
      %s212 = sadd.s32 %s211, 1
      %s213 = scalar_select %p210, %s211, %s212
      %p216 = pneg %p210
      %p217 = scmp.eq.s32.totalorder %s23, 1
      %p218 = por %p216, %p217
      %p219 = scmp.ne.s32.totalorder %s211, %s214
      %p220 = scmp.eq.s32.totalorder %s23, 0
      %p221 = por %p219, %p220
      %p222 = scmp.ne.s32.totalorder %s211, %s214
      %p223 = scmp.eq.s32.totalorder %s28, 1
      %p224 = por %p222, %p223
      %p225 = scmp.ne.s32.totalorder %s214, %s215
      %p226 = scmp.eq.s32.totalorder %s28, 0
      %p227 = por %p225, %p226
      %p228 = scmp.ne.s32.totalorder %s214, %s215
      %p229 = scmp.eq.s32.totalorder %s29, 1
      %p230 = por %p228, %p229
      %p232 = scmp.ne.s32.totalorder %s215, %s231
      %p233 = scmp.eq.s32.totalorder %s29, 0
      %p234 = por %p232, %p233
      %s235 = ssub.s32 %s23, %s30
      %p236 = scmp.eq.s32.totalorder %s235, 0
      %s238 = sadd.s32 %s237, 1
      %s239 = scalar_select %p236, %s237, %s238
      %p242 = pneg %p236
      %p243 = scmp.eq.s32.totalorder %s23, 1
      %p244 = por %p242, %p243
      %p245 = scmp.ne.s32.totalorder %s237, %s240
      %p246 = scmp.eq.s32.totalorder %s23, 0
      %p247 = por %p245, %p246
      %p248 = scmp.ne.s32.totalorder %s237, %s240
      %p249 = scmp.eq.s32.totalorder %s28, 1
      %p250 = por %p248, %p249
      %p251 = scmp.ne.s32.totalorder %s240, %s241
      %p252 = scmp.eq.s32.totalorder %s28, 0
      %p253 = por %p251, %p252
      %p254 = scmp.ne.s32.totalorder %s240, %s241
      %p255 = scmp.eq.s32.totalorder %s29, 1
      %p256 = por %p254, %p255
      %p258 = scmp.ne.s32.totalorder %s241, %s257
      %p259 = scmp.eq.s32.totalorder %s29, 0
      %p260 = por %p258, %p259
      %p261 = scmp.le.s32.totalorder 1, %s23
      %p262 = scmp.lt.s32.totalorder %s23, 3
      %p263 = pnand %p261, %p262
      %p264 = pneg %p263
      // Predicated region
      $region9: #{tpu_custom_call.1} parent=5 // pred_check
        _
      $region10: #{tpu_custom_call.1} parent=5 // pred_check_branch
        %266 = sbr.rel (%p263) target = $region12
      $region11: #{tpu_custom_call.1} parent=5 // pred_region
        %s267 = ssub.s32 %s23, 1
        // Predicated region
        $region13: #{tpu_custom_call.1} parent=11 // pred_check
          %p268 = pneg %p96
        $region14: #{tpu_custom_call.1} parent=11 // pred_check_branch
          %270 = sbr.rel (%p268) target = $region16
        $region15: #{tpu_custom_call.1} parent=11 // pred_region
          %s272 = ssub.s32 512, 512
          %273 = vsyncadd [#allocation3], %s272
          %s274 = sshll.u32 [#allocation2], 4
          %s275 = int_to_ptr.vmem [resolvable:$true] %s274
          %280 = dma.hbm_to_vmem [thread:$0]  %s2, 512, %s275, [#allocation3], 128, 128, 8
        $region16: #{tpu_custom_call.1} parent=11 // pred_fallthru
          _
        // Predicated region
        $region17: #{tpu_custom_call.1} parent=11 // pred_check
          %p281 = pneg %p117
        $region18: #{tpu_custom_call.1} parent=11 // pred_check_branch
          %283 = sbr.rel (%p281) target = $region20
        $region19: #{tpu_custom_call.1} parent=11 // pred_region
          _
        $region20: #{tpu_custom_call.1} parent=11 // pred_fallthru
          _
        // Predicated region
        $region21: #{tpu_custom_call.1} parent=11 // pred_check
          %p284 = pneg %p138
        $region22: #{tpu_custom_call.1} parent=11 // pred_check_branch
          %286 = sbr.rel (%p284) target = $region24
        $region23: #{tpu_custom_call.1} parent=11 // pred_region
          _
        $region24: #{tpu_custom_call.1} parent=11 // pred_fallthru
          _
        // Predicated region
        $region25: #{tpu_custom_call.1} parent=11 // pred_check
          %p287 = pneg %p159
        $region26: #{tpu_custom_call.1} parent=11 // pred_check_branch
          %289 = sbr.rel (%p287) target = $region28
        $region27: #{tpu_custom_call.1} parent=11 // pred_region
          _
        $region28: #{tpu_custom_call.1} parent=11 // pred_fallthru
          _
        // Predicated region
        $region29: #{tpu_custom_call.1} parent=11 // pred_check
          %p290 = pneg %p180
        $region30: #{tpu_custom_call.1} parent=11 // pred_check_branch
          %292 = sbr.rel (%p290) target = $region32
        $region31: #{tpu_custom_call.1} parent=11 // pred_region
          _
        $region32: #{tpu_custom_call.1} parent=11 // pred_fallthru
          _
        // Predicated region
        $region33: #{tpu_custom_call.1} parent=11 // pred_check
          %p293 = pneg %p201
        $region34: #{tpu_custom_call.1} parent=11 // pred_check_branch
          %295 = sbr.rel (%p293) target = $region36
        $region35: #{tpu_custom_call.1} parent=11 // pred_region
          _
        $region36: #{tpu_custom_call.1} parent=11 // pred_fallthru
          _
      $region12: #{tpu_custom_call.1} parent=5 // pred_fallthru
        _
      %p296 = scmp.lt.s32.totalorder %s23, 2
      // Predicated region
      $region37: #{tpu_custom_call.1} parent=5 // pred_check
        %p297 = pneg %p296
      $region38: #{tpu_custom_call.1} parent=5 // pred_check_branch
        %299 = sbr.rel (%p297) target = $region40
      $region39: #{tpu_custom_call.1} parent=5 // pred_region
        // Predicated region
        $region41: #{tpu_custom_call.1} parent=39 // pred_check
          %p300 = pneg %p43
        $region42: #{tpu_custom_call.1} parent=39 // pred_check_branch
          %302 = sbr.rel (%p300) target = $region44
        $region43: #{tpu_custom_call.1} parent=39 // pred_region
          %p303 = scmp.lt.s32.totalorder %s23, 1
          %s304 = scalar_select %p303, %s23, 1
          %s305 = smul.addr %s304, 2
          %s306 = smul.addr %s305, 8
          %s307 = scalar_lea.vmem %s0, %s306
        $region44: #{tpu_custom_call.1} parent=39 // pred_fallthru
          _
        // Predicated region
        $region45: #{tpu_custom_call.1} parent=39 // pred_check
          %p308 = pneg %p69
        $region46: #{tpu_custom_call.1} parent=39 // pred_check_branch
          %310 = sbr.rel (%p308) target = $region48
        $region47: #{tpu_custom_call.1} parent=39 // pred_region
          %p311 = scmp.lt.s32.totalorder %s23, 1
          %s312 = scalar_select %p311, %s23, 1
          %s313 = smul.addr %s312, 2
          %s314 = smul.addr %s313, 8
          %s315 = scalar_lea.vmem %s1, %s314
        $region48: #{tpu_custom_call.1} parent=39 // pred_fallthru
          _
      $region40: #{tpu_custom_call.1} parent=5 // pred_fallthru
        _
      %p316 = scmp.le.s32.totalorder 1, %s23
      %p317 = scmp.lt.s32.totalorder %s23, 3
      %p318 = pnand %p316, %p317
      %p319 = pneg %p318
      // Predicated region
      $region49: #{tpu_custom_call.1} parent=5 // pred_check
        _
      $region50: #{tpu_custom_call.1} parent=5 // pred_check_branch
        %321 = sbr.rel (%p318) target = $region52
      $region51: #{tpu_custom_call.1} parent=5 // pred_region
        %s322 = ssub.s32 %s23, 1
        // Predicated region
        $region53: #{tpu_custom_call.1} parent=51 // pred_check
          %p323 = pneg %p96
        $region54: #{tpu_custom_call.1} parent=51 // pred_check_branch
          %325 = sbr.rel (%p323) target = $region56
        $region55: #{tpu_custom_call.1} parent=51 // pred_region
          %326 = dma.done [#allocation3], 512
        $region56: #{tpu_custom_call.1} parent=51 // pred_fallthru
          _
        %p327 = scmp.lt.s32.totalorder %s28, 1
        %s328 = scalar_select %p327, %s28, 1
        %s329 = smul.addr %s328, 2
        %s330 = smul.addr %s329, 8
        %s331 = scalar_lea.vmem %s0, %s330
        %p332 = pneg %p49
        %p333 = pneg %p46
        %p334 = scmp.lt.s32.totalorder %s28, 1
        %s335 = scalar_select %p334, %s28, 1
        %s336 = smul.addr %s335, 2
        %s337 = smul.addr %s336, 8
        %s338 = scalar_lea.vmem %s1, %s337
        %p339 = pneg %p75
        %p340 = pneg %p72
        %p341 = pneg %p96
        %p342 = pneg %p93
        %p343 = pneg %p117
        %p344 = pneg %p114
        %p345 = pneg %p138
        %p346 = pneg %p135
        %p347 = pneg %p159
        %p348 = pneg %p156
        %p349 = pneg %p180
        %p350 = pneg %p177
        %p351 = pneg %p201
        %p352 = pneg %p198
        %p353 = pneg %p227
        %p354 = pneg %p224
        %s355 = sand.u32 %s214, 1
        %s356 = scalar_lea.sflag [#allocation4], %s355
        %s357 = sand.u32 %s214, 1
        %s358 = smul.addr %s357, 16
        %s359 = scalar_lea.vmem [#allocation5], %s358
        %p360 = pneg %p253
        %p361 = pneg %p250
        %s362 = sand.u32 %s240, 1
        %s363 = scalar_lea.sflag [#allocation7], %s362
        %s364 = sand.u32 %s240, 1
        %s365 = smul.addr %s364, 16
        %s366 = scalar_lea.vmem [#allocation6], %s365
        %p367 = scmp.lt.s32.totalorder %s28, 1
        %s368 = scalar_select %p367, %s28, 1
        %s369 = smul.addr %s368, 2
        %s370 = smul.addr %s369, 8
        %s371 = scalar_lea.vmem %s0, %s370
        %p372 = scmp.lt.s32.totalorder %s28, 1
        %s373 = scalar_select %p372, %s28, 1
        %s374 = smul.addr %s373, 2
        %s375 = smul.addr %s374, 8
        %s376 = scalar_lea.vmem %s1, %s375
        %v377 = vld [vmem:[%s371] sm:$0xff]
        %v378 = vld [vmem:[%s371 + $0x8] sm:$0xff]
        %v379 = vld [vmem:[%s376] sm:$0xff]
        %v380 = vld [vmem:[%s376 + $0x8] sm:$0xff]
        %v381 = vmul.f32 %v377, %v377
        %v382 = vmul.f32 %v378, %v378
        %v383 = vmul.f32 %v379, %v379
        %v384 = vmul.f32 %v380, %v380
        %v385 = vadd.f32 %v381, %v383
        %v386 = vadd.f32 %v382, %v384
        %v387 = vrsqrt.pop %v385
        %v388 = vmul.f32 %v385, %v387
        %vm389 = vcmp.eq.f32.partialorder %v385, inf
        %v390 = vsel %vm389, %v385, %v388
        %vm391 = vcmp.eq.f32.partialorder %v385, 0.0
        %v392 = vand.u32 %v385, 2147483648
        %v393 = vsel %vm391, %v392, %v390
        %v394 = vrsqrt.pop %v386
        %v395 = vmul.f32 %v386, %v394
        %vm396 = vcmp.eq.f32.partialorder %v386, inf
        %v397 = vsel %vm396, %v386, %v395
        %vm398 = vcmp.eq.f32.partialorder %v386, 0.0
        %v399 = vand.u32 %v386, 2147483648
        %v400 = vsel %vm398, %v399, %v397
        %v401 = vand.u32 2147483647, %v377
        %v402 = vand.u32 2147483647, %v379
        %v403 = vmin.f32 %v401, %v402
        %v404 = vmax.f32 %v401, %v402
        %v405 = vrcp.pop %v404
        %v406 = vmul.f32 %v403, %v405
        %v407 = vmul.f32 %v406, %v406
        %v408 = vmul.f32 0.002785687, %v407
        %v409 = vadd.f32 %v408, -0.015866
        %v410 = vmul.f32 %v409, %v407
        %v411 = vadd.f32 %v410, 0.04247222
        %v412 = vmul.f32 %v411, %v407
        %v413 = vadd.f32 %v412, -0.074975304
        %v414 = vmul.f32 %v413, %v407
        %v415 = vadd.f32 %v414, 0.1064488
        %v416 = vmul.f32 %v415, %v407
        %v417 = vadd.f32 %v416, -0.14207031
        %v418 = vmul.f32 %v417, %v407
        %v419 = vadd.f32 %v418, 0.19993454
        %v420 = vmul.f32 %v419, %v407
        %v421 = vadd.f32 %v420, -0.33333147
        %v422 = vmul.f32 %v421, %v407
        %v423 = vmul.f32 %v422, %v406
        %v424 = vadd.f32 %v423, %v406
        %vm425 = vcmp.gt.f32.partialorder %v402, %v401
        %v426 = vsub.f32 1.5707964, %v424
        %v427 = vsel %vm425, %v426, %v424
        %vm428 = vcmp.lt.f32.partialorder %v377, 0.0
        %v429 = vsub.f32 3.1415927, %v427
        %v430 = vsel %vm428, %v429, %v427
        %vm431 = vcmp.lt.s32.totalorder %v377, 0
        %v432 = vsel %vm431, 3.1415927, 0.0
        %vm433 = vcmp.eq.f32.partialorder %v379, 0.0
        %v434 = vsel %vm433, %v432, %v430
        %vm435 = vcmp.ne.f32.partialorder %v377, %v377
        %vm436 = vcmp.ne.f32.partialorder %v379, %v379
        %vm437 = vmor %vm435, %vm436
        %v438 = vsel %vm437, nan, %v434
        %vm439 = vcmp.lt.f32.partialorder %v377, 0.0
        %v440 = vsel %vm439, 2.3561945, 0.7853982
        %vm441 = vcmp.eq.s32.totalorder %v401, inf
        %vm442 = vcmp.eq.s32.totalorder %v402, inf
        %vm443 = vmand %vm441, %vm442
        %v444 = vsel %vm443, %v440, %v438
        %v445 = vand.u32 2147483647, %v444
        %v446 = vand.u32 %v379, 2147483648
        %v447 = vor.u32 %v445, %v446
        %v448 = vand.u32 2147483647, %v378
        %v449 = vand.u32 2147483647, %v380
        %v450 = vmin.f32 %v448, %v449
        %v451 = vmax.f32 %v448, %v449
        %v452 = vrcp.pop %v451
        %v453 = vmul.f32 %v450, %v452
        %v454 = vmul.f32 %v453, %v453
        %v455 = vmul.f32 0.002785687, %v454
        %v456 = vadd.f32 %v455, -0.015866
        %v457 = vmul.f32 %v456, %v454
        %v458 = vadd.f32 %v457, 0.04247222
        %v459 = vmul.f32 %v458, %v454
        %v460 = vadd.f32 %v459, -0.074975304
        %v461 = vmul.f32 %v460, %v454
        %v462 = vadd.f32 %v461, 0.1064488
        %v463 = vmul.f32 %v462, %v454
        %v464 = vadd.f32 %v463, -0.14207031
        %v465 = vmul.f32 %v464, %v454
        %v466 = vadd.f32 %v465, 0.19993454
        %v467 = vmul.f32 %v466, %v454
        %v468 = vadd.f32 %v467, -0.33333147
        %v469 = vmul.f32 %v468, %v454
        %v470 = vmul.f32 %v469, %v453
        %v471 = vadd.f32 %v470, %v453
        %vm472 = vcmp.gt.f32.partialorder %v449, %v448
        %v473 = vsub.f32 1.5707964, %v471
        %v474 = vsel %vm472, %v473, %v471
        %vm475 = vcmp.lt.f32.partialorder %v378, 0.0
        %v476 = vsub.f32 3.1415927, %v474
        %v477 = vsel %vm475, %v476, %v474
        %vm478 = vcmp.lt.s32.totalorder %v378, 0
        %v479 = vsel %vm478, 3.1415927, 0.0
        %vm480 = vcmp.eq.f32.partialorder %v380, 0.0
        %v481 = vsel %vm480, %v479, %v477
        %vm482 = vcmp.ne.f32.partialorder %v378, %v378
        %vm483 = vcmp.ne.f32.partialorder %v380, %v380
        %vm484 = vmor %vm482, %vm483
        %v485 = vsel %vm484, nan, %v481
        %vm486 = vcmp.lt.f32.partialorder %v378, 0.0
        %v487 = vsel %vm486, 2.3561945, 0.7853982
        %vm488 = vcmp.eq.s32.totalorder %v448, inf
        %vm489 = vcmp.eq.s32.totalorder %v449, inf
        %vm490 = vmand %vm488, %vm489
        %v491 = vsel %vm490, %v487, %v485
        %v492 = vand.u32 2147483647, %v491
        %v493 = vand.u32 %v380, 2147483648
        %v494 = vor.u32 %v492, %v493
        %v495 = vld [vmem:[#allocation2] sm:$0xff]
        %v496 = vld [vmem:[#allocation2 + $0x8] sm:$0xff]
        %s497 = scalar_lea.vmem [#allocation2], 16
        %v498 = vld [vmem:[%s497] sm:$0xff]
        %v499 = vld [vmem:[%s497 + $0x8] sm:$0xff]
        %v500 = vld [vmem:[%s3] sm:$0xff]
        %v501 = vld [vmem:[%s3 + $0x8] sm:$0xff]
        %s502 = scalar_lea.vmem %s3, 16
        %v503 = vld [vmem:[%s502] sm:$0xff]
        %v504 = vld [vmem:[%s502 + $0x8] sm:$0xff]
        %506 = vset.pattern.permute.xlu0 0
        %507 = vperm.xlu0 %506, %v500
        %v508 = vpop.permute.xlu0 %507
        %511 = vset.pattern.permute.xlu0 0
        %512 = vperm.xlu0 %511, %v501
        %v513 = vpop.permute.xlu0 %512
        %vm515 = vcmask 130048
        %v517 = vsel %vm515, %v495, 0
        %v520 = vsel %vm515, %v496, 0
        %522 = vmatprep.subr.mxu0 %v400
        %523 = vmatpush1.msra.mxu0 %v393
        %524 = vmatprep.subr.mxu0 %v494
        %525 = vmatpush1.msra.mxu0 %v447
        %526 = vmatprep.subr.mxu0 0.0
        %527 = vmatpush1.msra.mxu0 0.0
        %528 = vmatprep.subr.mxu0 0.0
        %529 = vmatpush1.msra.mxu0 0.0
        %530 = vmatprep.subr.mxu0 0.0
        %531 = vmatpush1.msra.mxu0 0.0
        %532 = vmatprep.subr.mxu0 0.0
        %533 = vmatpush1.msra.mxu0 0.0
        %534 = vmatprep.subr.mxu0 0.0
        %535 = vmatpush1.msra.mxu0 0.0
        %536 = vmatprep.subr.mxu0 0.0
        %537 = vmatpush1.msra.mxu0 0.0
        %538 = vmatprep.subr.mxu0 0.0
        %539 = vmatpush1.msra.mxu0 0.0
        %540 = vmatprep.subr.mxu0 0.0
        %541 = vmatpush1.msra.mxu0 0.0
        %542 = vmatprep.subr.mxu0 0.0
        %543 = vmatpush1.msra.mxu0 0.0
        %544 = vmatprep.subr.mxu0 0.0
        %545 = vmatpush1.msra.mxu0 0.0
        %546 = vmatprep.subr.mxu0 0.0
        %547 = vmatpush1.msra.mxu0 0.0
        %548 = vmatprep.subr.mxu0 0.0
        %549 = vmatpush1.msra.mxu0 0.0
        %550 = vmatprep.subr.mxu0 0.0
        %551 = vmatpush1.msra.mxu0 0.0
        %552 = vmatprep.subr.mxu0 0.0
        %553 = vmatpush1.msra.mxu0 0.0
        %554 = vmatprep.subr.mxu0 0.0
        %555 = vmatpush1.msra.mxu0 0.0
        %556 = vmatprep.subr.mxu0 0.0
        %557 = vmatpush1.msra.mxu0 0.0
        %558 = vmatprep.subr.mxu0 0.0
        %559 = vmatpush1.msra.mxu0 0.0
        %560 = vmatprep.subr.mxu0 0.0
        %561 = vmatpush1.msra.mxu0 0.0
        %562 = vmatprep.subr.mxu0 0.0
        %563 = vmatpush1.msra.mxu0 0.0
        %564 = vmatprep.subr.mxu0 0.0
        %565 = vmatpush1.msra.mxu0 0.0
        %566 = vmatprep.subr.mxu0 0.0
        %567 = vmatpush1.msra.mxu0 0.0
        %568 = vmatprep.subr.mxu0 0.0
        %569 = vmatpush1.msra.mxu0 0.0
        %570 = vmatprep.subr.mxu0 0.0
        %571 = vmatpush1.msra.mxu0 0.0
        %572 = vmatprep.subr.mxu0 0.0
        %573 = vmatpush1.msra.mxu0 0.0
        %574 = vmatprep.subr.mxu0 0.0
        %575 = vmatpush1.msra.mxu0 0.0
        %576 = vmatprep.subr.mxu0 0.0
        %577 = vmatpush1.msra.mxu0 0.0
        %578 = vmatprep.subr.mxu0 0.0
        %579 = vmatpush1.msra.mxu0 0.0
        %580 = vmatprep.subr.mxu0 0.0
        %581 = vmatpush1.msra.mxu0 0.0
        %582 = vmatprep.subr.mxu0 0.0
        %583 = vmatpush1.msra.mxu0 0.0
        %584 = vmatprep.subr.mxu0 0.0
        %585 = vmatpush1.msra.mxu0 0.0
        %586 = vmatprep.mubr.f32.mxu0 0.0
        %587 = vmatmul.mubr.f32.gmra.mrb[0].mxu0 %v517
        %v588 = vpop.f32.mrb[0].mxu0
        %v589 = vadd.f32 %v508, %v588
        %v590 = vpop.f32.mrb[0].mxu0
        %v591 = vadd.f32 %v508, %v590
        %592 = vmatprep.mubr.f32.mxu0 0.0
        %593 = vmatmul.mubr.f32.gmra.mrb[0].mxu0 %v520
        %v594 = vpop.f32.mrb[0].mxu0
        %v595 = vadd.f32 %v513, %v594
        %v596 = vpop.f32.mrb[0].mxu0
        %v597 = vadd.f32 %v513, %v596
        %598 = vdwg.mxu0
        %vm599 = vcmp.ge.f32.partialorder %v589, 0.0
        %vm600 = vcmp.ge.f32.partialorder %v591, 0.0
        %vm601 = vcmp.ge.f32.partialorder %v595, 0.0
        %vm602 = vcmp.ge.f32.partialorder %v597, 0.0
        %v603 = vmul.f32 %v589, 0.1
        %v604 = vmul.f32 %v591, 0.1
        %v605 = vmul.f32 %v595, 0.1
        %v606 = vmul.f32 %v597, 0.1
        %v607 = vsel %vm599, %v589, %v603
        %v608 = vsel %vm600, %v591, %v604
        %v609 = vsel %vm601, %v595, %v605
        %v610 = vsel %vm602, %v597, %v606
        %v611 = vadd.f32 %v607, %v608
        %612 = vadd.xlane.f32.xlu0 %v611
        %v613 = vpop.xlane.xlu0 %612
        %v614 = vadd.f32 %v609, %v610
        %615 = vadd.xlane.f32.xlu0 %v614
        %v616 = vpop.xlane.xlu0 %615
        %v617 = vrcp.pop 256.0
        %v618 = vmul.f32 %v613, %v617
        %v619 = vmul.f32 %v616, %v617
        %v620 = vld [vmem:[%s4] sm:$0x3]
        %v621 = vld [vmem:[%s5] sm:$0x3]
        %v623 = vsel %vm515, %v620, 0
        %625 = vmatprep.subr.mxu0 0.0
        %626 = vmatpush1.msra.mxu0 %v618
        %627 = vmatprep.subr.mxu0 0.0
        %628 = vmatpush1.msra.mxu0 %v619
        %629 = vmatprep.subr.mxu0 0.0
        %630 = vmatpush1.msra.mxu0 0.0
        %631 = vmatprep.subr.mxu0 0.0
        %632 = vmatpush1.msra.mxu0 0.0
        %633 = vmatprep.subr.mxu0 0.0
        %634 = vmatpush1.msra.mxu0 0.0
        %635 = vmatprep.subr.mxu0 0.0
        %636 = vmatpush1.msra.mxu0 0.0
        %637 = vmatprep.subr.mxu0 0.0
        %638 = vmatpush1.msra.mxu0 0.0
        %639 = vmatprep.subr.mxu0 0.0
        %640 = vmatpush1.msra.mxu0 0.0
        %641 = vmatprep.subr.mxu0 0.0
        %642 = vmatpush1.msra.mxu0 0.0
        %643 = vmatprep.subr.mxu0 0.0
        %644 = vmatpush1.msra.mxu0 0.0
        %645 = vmatprep.subr.mxu0 0.0
        %646 = vmatpush1.msra.mxu0 0.0
        %647 = vmatprep.subr.mxu0 0.0
        %648 = vmatpush1.msra.mxu0 0.0
        %649 = vmatprep.subr.mxu0 0.0
        %650 = vmatpush1.msra.mxu0 0.0
        %651 = vmatprep.subr.mxu0 0.0
        %652 = vmatpush1.msra.mxu0 0.0
        %653 = vmatprep.subr.mxu0 0.0
        %654 = vmatpush1.msra.mxu0 0.0
        %655 = vmatprep.subr.mxu0 0.0
        %656 = vmatpush1.msra.mxu0 0.0
        %657 = vmatprep.subr.mxu0 0.0
        %658 = vmatpush1.msra.mxu0 0.0
        %659 = vmatprep.subr.mxu0 0.0
        %660 = vmatpush1.msra.mxu0 0.0
        %661 = vmatprep.subr.mxu0 0.0
        %662 = vmatpush1.msra.mxu0 0.0
        %663 = vmatprep.subr.mxu0 0.0
        %664 = vmatpush1.msra.mxu0 0.0
        %665 = vmatprep.subr.mxu0 0.0
        %666 = vmatpush1.msra.mxu0 0.0
        %667 = vmatprep.subr.mxu0 0.0
        %668 = vmatpush1.msra.mxu0 0.0
        %669 = vmatprep.subr.mxu0 0.0
        %670 = vmatpush1.msra.mxu0 0.0
        %671 = vmatprep.subr.mxu0 0.0
        %672 = vmatpush1.msra.mxu0 0.0
        %673 = vmatprep.subr.mxu0 0.0
        %674 = vmatpush1.msra.mxu0 0.0
        %675 = vmatprep.subr.mxu0 0.0
        %676 = vmatpush1.msra.mxu0 0.0
        %677 = vmatprep.subr.mxu0 0.0
        %678 = vmatpush1.msra.mxu0 0.0
        %679 = vmatprep.subr.mxu0 0.0
        %680 = vmatpush1.msra.mxu0 0.0
        %681 = vmatprep.subr.mxu0 0.0
        %682 = vmatpush1.msra.mxu0 0.0
        %683 = vmatprep.subr.mxu0 0.0
        %684 = vmatpush1.msra.mxu0 0.0
        %685 = vmatprep.subr.mxu0 0.0
        %686 = vmatpush1.msra.mxu0 0.0
        %687 = vmatprep.subr.mxu0 0.0
        %688 = vmatpush1.msra.mxu0 0.0
        %689 = vmatprep.mubr.f32.mxu0 0.0
        %690 = vmatmul.mubr.f32.gmra.mrb[0].mxu0 %v623
        %v691 = vpop.f32.mrb[0].mxu0
        %v692 = vadd.f32 %v621, %v691
        %v693 = vpop.f32.mrb[0].mxu0
        %694 = vdwg.mxu0
        %v695 = vmax.f32 %v692, 0.0
        %v696 = vld [vmem:[%s6] sm:$0xff]
        %v697 = vld [vmem:[%s6 + $0x8] sm:$0xff]
        %v698 = vld [vmem:[%s7] sm:$0xff]
        %v699 = vld [vmem:[%s7 + $0x8] sm:$0xff]
        %vm700 = vcmask 15360
        %v702 = vsel %vm700, %v696, 0
        %v705 = vsel %vm700, %v697, 0
        %vm707 = vcmask 1041408
        %v709 = vsel %vm707, %v695, 0
        %711 = vmatprep.subr.mxu0 0.0
        %712 = vmatpush1.msra.mxu0 %v709
        %713 = vmatprep.subr.mxu0 0.0
        %714 = vmatpush1.msra.mxu0 0.0
        %715 = vmatprep.subr.mxu0 0.0
        %716 = vmatpush1.msra.mxu0 0.0
        %717 = vmatprep.subr.mxu0 0.0
        %718 = vmatpush1.msra.mxu0 0.0
        %719 = vmatprep.subr.mxu0 0.0
        %720 = vmatpush1.msra.mxu0 0.0
        %721 = vmatprep.subr.mxu0 0.0
        %722 = vmatpush1.msra.mxu0 0.0
        %723 = vmatprep.subr.mxu0 0.0
        %724 = vmatpush1.msra.mxu0 0.0
        %725 = vmatprep.subr.mxu0 0.0
        %726 = vmatpush1.msra.mxu0 0.0
        %727 = vmatprep.subr.mxu0 0.0
        %728 = vmatpush1.msra.mxu0 0.0
        %729 = vmatprep.subr.mxu0 0.0
        %730 = vmatpush1.msra.mxu0 0.0
        %731 = vmatprep.subr.mxu0 0.0
        %732 = vmatpush1.msra.mxu0 0.0
        %733 = vmatprep.subr.mxu0 0.0
        %734 = vmatpush1.msra.mxu0 0.0
        %735 = vmatprep.subr.mxu0 0.0
        %736 = vmatpush1.msra.mxu0 0.0
        %737 = vmatprep.subr.mxu0 0.0
        %738 = vmatpush1.msra.mxu0 0.0
        %739 = vmatprep.subr.mxu0 0.0
        %740 = vmatpush1.msra.mxu0 0.0
        %741 = vmatprep.subr.mxu0 0.0
        %742 = vmatpush1.msra.mxu0 0.0
        %743 = vmatprep.subr.mxu0 0.0
        %744 = vmatpush1.msra.mxu0 0.0
        %745 = vmatprep.subr.mxu0 0.0
        %746 = vmatpush1.msra.mxu0 0.0
        %747 = vmatprep.subr.mxu0 0.0
        %748 = vmatpush1.msra.mxu0 0.0
        %749 = vmatprep.subr.mxu0 0.0
        %750 = vmatpush1.msra.mxu0 0.0
        %751 = vmatprep.subr.mxu0 0.0
        %752 = vmatpush1.msra.mxu0 0.0
        %753 = vmatprep.subr.mxu0 0.0
        %754 = vmatpush1.msra.mxu0 0.0
        %755 = vmatprep.subr.mxu0 0.0
        %756 = vmatpush1.msra.mxu0 0.0
        %757 = vmatprep.subr.mxu0 0.0
        %758 = vmatpush1.msra.mxu0 0.0
        %759 = vmatprep.subr.mxu0 0.0
        %760 = vmatpush1.msra.mxu0 0.0
        %761 = vmatprep.subr.mxu0 0.0
        %762 = vmatpush1.msra.mxu0 0.0
        %763 = vmatprep.subr.mxu0 0.0
        %764 = vmatpush1.msra.mxu0 0.0
        %765 = vmatprep.subr.mxu0 0.0
        %766 = vmatpush1.msra.mxu0 0.0
        %767 = vmatprep.subr.mxu0 0.0
        %768 = vmatpush1.msra.mxu0 0.0
        %769 = vmatprep.subr.mxu0 0.0
        %770 = vmatpush1.msra.mxu0 0.0
        %771 = vmatprep.subr.mxu0 0.0
        %772 = vmatpush1.msra.mxu0 0.0
        %773 = vmatprep.subr.mxu0 0.0
        %774 = vmatpush1.msra.mxu0 0.0
        %775 = vmatprep.mubr.f32.mxu0 0.0
        %776 = vmatmul.mubr.f32.gmra.mrb[0].mxu0 %v702
        %v777 = vpop.f32.mrb[0].mxu0
        %v778 = vadd.f32 %v698, %v777
        %v779 = vpop.f32.mrb[0].mxu0
        %780 = vmatprep.mubr.f32.mxu0 0.0
        %781 = vmatmul.mubr.f32.gmra.mrb[0].mxu0 %v705
        %v782 = vpop.f32.mrb[0].mxu0
        %v783 = vadd.f32 %v699, %v782
        %v784 = vpop.f32.mrb[0].mxu0
        %785 = vdwg.mxu0
        %v786 = vxor.u32 %v778, 2147483648
        %v787 = vxor.u32 %v783, 2147483648
        %v788 = vmul.f32 %v786, 1.442695
        %v789 = vpow.pop %v788
        %v790 = vmul.f32 %v787, 1.442695
        %v791 = vpow.pop %v790
        %v792 = vadd.f32 %v789, 1.0
        %v793 = vadd.f32 %v791, 1.0
        %v794 = vrcp.pop %v792
        %v795 = vmul.f32 1.0, %v794
        %v796 = vrcp.pop %v793
        %v797 = vmul.f32 1.0, %v796
        %799 = vset.pattern.permute.xlu0 0
        %800 = vperm.xlu0 %799, %v795
        %v801 = vpop.permute.xlu0 %800
        %804 = vset.pattern.permute.xlu0 0
        %805 = vperm.xlu0 %804, %v797
        %v806 = vpop.permute.xlu0 %805
        %v808 = vmul.f32 %v607, %v801
        %v809 = vmul.f32 %v608, %v801
        %v810 = vmul.f32 %v609, %v806
        %v811 = vmul.f32 %v610, %v806
        %v813 = vsel %vm515, %v498, 0
        %v816 = vsel %vm515, %v499, 0
        %818 = vmatprep.subr.mxu0 %v809
        %819 = vmatpush1.msra.mxu0 %v808
        %820 = vmatprep.subr.mxu0 %v811
        %821 = vmatpush1.msra.mxu0 %v810
        %822 = vmatprep.subr.mxu0 0.0
        %823 = vmatpush1.msra.mxu0 0.0
        %824 = vmatprep.subr.mxu0 0.0
        %825 = vmatpush1.msra.mxu0 0.0
        %826 = vmatprep.subr.mxu0 0.0
        %827 = vmatpush1.msra.mxu0 0.0
        %828 = vmatprep.subr.mxu0 0.0
        %829 = vmatpush1.msra.mxu0 0.0
        %830 = vmatprep.subr.mxu0 0.0
        %831 = vmatpush1.msra.mxu0 0.0
        %832 = vmatprep.subr.mxu0 0.0
        %833 = vmatpush1.msra.mxu0 0.0
        %834 = vmatprep.subr.mxu0 0.0
        %835 = vmatpush1.msra.mxu0 0.0
        %836 = vmatprep.subr.mxu0 0.0
        %837 = vmatpush1.msra.mxu0 0.0
        %838 = vmatprep.subr.mxu0 0.0
        %839 = vmatpush1.msra.mxu0 0.0
        %840 = vmatprep.subr.mxu0 0.0
        %841 = vmatpush1.msra.mxu0 0.0
        %842 = vmatprep.subr.mxu0 0.0
        %843 = vmatpush1.msra.mxu0 0.0
        %844 = vmatprep.subr.mxu0 0.0
        %845 = vmatpush1.msra.mxu0 0.0
        %846 = vmatprep.subr.mxu0 0.0
        %847 = vmatpush1.msra.mxu0 0.0
        %848 = vmatprep.subr.mxu0 0.0
        %849 = vmatpush1.msra.mxu0 0.0
        %850 = vmatprep.subr.mxu0 0.0
        %851 = vmatpush1.msra.mxu0 0.0
        %852 = vmatprep.subr.mxu0 0.0
        %853 = vmatpush1.msra.mxu0 0.0
        %854 = vmatprep.subr.mxu0 0.0
        %855 = vmatpush1.msra.mxu0 0.0
        %856 = vmatprep.subr.mxu0 0.0
        %857 = vmatpush1.msra.mxu0 0.0
        %858 = vmatprep.subr.mxu0 0.0
        %859 = vmatpush1.msra.mxu0 0.0
        %860 = vmatprep.subr.mxu0 0.0
        %861 = vmatpush1.msra.mxu0 0.0
        %862 = vmatprep.subr.mxu0 0.0
        %863 = vmatpush1.msra.mxu0 0.0
        %864 = vmatprep.subr.mxu0 0.0
        %865 = vmatpush1.msra.mxu0 0.0
        %866 = vmatprep.subr.mxu0 0.0
        %867 = vmatpush1.msra.mxu0 0.0
        %868 = vmatprep.subr.mxu0 0.0
        %869 = vmatpush1.msra.mxu0 0.0
        %870 = vmatprep.subr.mxu0 0.0
        %871 = vmatpush1.msra.mxu0 0.0
        %872 = vmatprep.subr.mxu0 0.0
        %873 = vmatpush1.msra.mxu0 0.0
        %874 = vmatprep.subr.mxu0 0.0
        %875 = vmatpush1.msra.mxu0 0.0
        %876 = vmatprep.subr.mxu0 0.0
        %877 = vmatpush1.msra.mxu0 0.0
        %878 = vmatprep.subr.mxu0 0.0
        %879 = vmatpush1.msra.mxu0 0.0
        %880 = vmatprep.subr.mxu0 0.0
        %881 = vmatpush1.msra.mxu0 0.0
        %882 = vmatprep.mubr.f32.mxu0 0.0
        %883 = vmatmul.mubr.f32.gmra.mrb[0].mxu0 %v813
        %v884 = vpop.f32.mrb[0].mxu0
        %v885 = vadd.f32 0.0, %v884
        %v886 = vpop.f32.mrb[0].mxu0
        %v887 = vadd.f32 0.0, %v886
        %888 = vmatprep.mubr.f32.mxu0 0.0
        %889 = vmatmul.mubr.f32.gmra.mrb[0].mxu0 %v816
        %v890 = vpop.f32.mrb[0].mxu0
        %v891 = vadd.f32 0.0, %v890
        %v892 = vpop.f32.mrb[0].mxu0
        %v893 = vadd.f32 0.0, %v892
        %894 = vdwg.mxu0
        %v895 = vadd.f32 %v393, %v885
        %v896 = vadd.f32 %v400, %v887
        %v897 = vadd.f32 %v447, %v891
        %v898 = vadd.f32 %v494, %v893
        %900 = vset.pattern.permute.xlu0 0
        %901 = vperm.xlu0 %900, %v503
        %v902 = vpop.permute.xlu0 %901
        %905 = vset.pattern.permute.xlu0 0
        %906 = vperm.xlu0 %905, %v504
        %v907 = vpop.permute.xlu0 %906
        %v909 = vadd.f32 %v895, %v902
        %v910 = vadd.f32 %v896, %v902
        %v911 = vadd.f32 %v897, %v907
        %v912 = vadd.f32 %v898, %v907
        %v913 = vand.u32 2147483647, %v911
        %vm914 = vcmp.le.f32.partialorder %v913, 0.7853982
        %vm915 = vcmp.lt.s32.totalorder %v911, 0
        %v916 = vand.u32 %v911, 2139095040
        %v917 = vshrl.u32 %v916, 23
        %v918 = vsub.s32 %v917, 127
        %v919 = vand.u32 2147483647, %v911
        %v920 = vand.u32 %v919, 8388607
        %v921 = vor.u32 %v920, 8388608
        %v922 = vsub.s32 0, %v921
        %v923 = vadd.s32 %v918, 1
        %vm924 = vcmp.gt.s32.totalorder %v923, 0
        %v925 = vsel %vm924, %v923, 0
        %v926 = vshrl.u32 %v925, 5
        %v927 = vand.u32 %v925, 31
        %v928 = vsub.s32 32, %v927
        %v929 = vshrl.u32 683565275, %v928
        %v930 = vshll.u32 683565275, %v927
        %v931 = vshrl.u32 2475754826, %v928
        %v932 = vor.u32 %v930, %v931
        %v933 = vshll.u32 2475754826, %v927
        %v934 = vshrl.u32 2131351028, %v928
        %v935 = vor.u32 %v933, %v934
        %v936 = vshll.u32 2131351028, %v927
        %v937 = vshrl.u32 2102212464, %v928
        %v938 = vor.u32 %v936, %v937
        %v939 = vshll.u32 2102212464, %v927
        %v940 = vshrl.u32 920167782, %v928
        %v941 = vor.u32 %v939, %v940
        %v942 = vshll.u32 920167782, %v927
        %v943 = vshrl.u32 1326507024, %v928
        %v944 = vor.u32 %v942, %v943
        %vm945 = vcmp.lt.s32.totalorder %v926, 1
        %vm946 = vcmp.lt.s32.totalorder %v926, 2
        %vm947 = vcmp.lt.s32.totalorder %v926, 3
        %vm948 = vcmp.lt.s32.totalorder %v926, 4
        %v949 = vsel %vm945, %v929, %v932
        %v950 = vsel %vm948, %v938, 2102212464
        %v951 = vsel %vm947, %v935, %v950
        %v952 = vsel %vm946, %v949, %v951
        %v953 = vsel %vm945, %v932, %v935
        %v954 = vsel %vm948, %v941, 920167782
        %v955 = vsel %vm947, %v938, %v954
        %v956 = vsel %vm946, %v953, %v955
        %v957 = vsel %vm945, %v935, %v938
        %v958 = vsel %vm948, %v944, 1326507024
        %v959 = vsel %vm947, %v941, %v958
        %v960 = vsel %vm946, %v957, %v959
        %v961 = vshll.u32 %v921, 8
        %v962 = vmul.u32.u64.compose %v961, %v960
        %v963 = vextract.low.u32 %v962
        %v964 = vextract.high.u32 %v962
        %v965 = vmul.u32.u64.compose %v961, %v956
        %v966 = vextract.low.u32 %v965
        %v967 = vextract.high.u32 %v965
        %v968 = vmul.u32 %v961, %v952
        %v969 = vadd.s32 %v964, %v966
        %vm970 = vc.u32 %v964, %v966
        %v971 = vadd.s32 %v967, 1
        %v972 = vsel %vm970, %v971, %v967
        %v973 = vadd.s32 %v968, %v972
        %v974 = vadd.s32 %v973, 536870912
        %v975 = vshrl.u32 %v974, 30
        %v976 = vshll.u32 %v975, 30
        %v977 = vsub.s32 %v973, %v976
        %vm978 = vcmp.lt.s32.totalorder %v977, 0
        %v979 = vsub.s32 0, %v977
        %v980 = vsel %vm978, %v979, %v977
        %v981 = vclz %v980
        %v982 = vsub.s32 %v981, 2
        %vm983 = vcmp.gt.s32.totalorder 0, %v982
        %v984 = vsel %vm983, 0, %v982
        %v985 = vsub.s32 32, %v984
        %v986 = vshll.u32 %v977, %v984
        %v987 = vshrl.u32 %v969, %v985
        %v988 = vor.u32 %v986, %v987
        %v989 = vsub.s32 4294967266, %v984
        %v990 = vadd.s32 %v989, 127
        %v991 = vshll.u32 %v990, 23
        %v992 = vor.u32 4788187, %v991
        %v993 = vand.u32 2147483647, %v992
        %v995 = vcvt.s32.f32 %v988
        %v996 = vmul.f32 %v995, %v993
        %v997 = vxor.u32 %v996, 2147483648
        %v998 = vsel %vm915, %v997, %v996
        %v999 = vsub.s32 4, %v975
        %v1000 = vsel %vm915, %v999, %v975
        %v1001 = vsel %vm914, %v911, %v998
        %v1002 = vsel %vm914, 0, %v1000
        %v1003 = vcosq.f32.pop %v1001
        %v1004 = vsinq.f32.pop %v1001
        %vm1005 = vweird.f32 %v911
        %v1006 = vand.u32 %v1002, 3
        %vm1007 = vcmp.lt.s32.totalorder %v1006, 2
        %vm1008 = vcmp.eq.s32.totalorder %v1006, 0
        %v1009 = vxor.u32 %v1004, 2147483648
        %v1010 = vsel %vm1008, %v1003, %v1009
        %vm1011 = vcmp.eq.s32.totalorder %v1006, 2
        %v1012 = vxor.u32 %v1003, 2147483648
        %v1013 = vsel %vm1011, %v1012, %v1004
        %v1014 = vsel %vm1007, %v1010, %v1013
        %v1015 = vsel %vm1005, nan, %v1014
        %v1016 = vand.u32 2147483647, %v912
        %vm1017 = vcmp.le.f32.partialorder %v1016, 0.7853982
        %vm1018 = vcmp.lt.s32.totalorder %v912, 0
        %v1019 = vand.u32 %v912, 2139095040
        %v1020 = vshrl.u32 %v1019, 23
        %v1021 = vsub.s32 %v1020, 127
        %v1022 = vand.u32 2147483647, %v912
        %v1023 = vand.u32 %v1022, 8388607
        %v1024 = vor.u32 %v1023, 8388608
        %v1025 = vsub.s32 0, %v1024
        %v1026 = vadd.s32 %v1021, 1
        %vm1027 = vcmp.gt.s32.totalorder %v1026, 0
        %v1028 = vsel %vm1027, %v1026, 0
        %v1029 = vshrl.u32 %v1028, 5
        %v1030 = vand.u32 %v1028, 31
        %v1031 = vsub.s32 32, %v1030
        %v1032 = vshrl.u32 683565275, %v1031
        %v1033 = vshll.u32 683565275, %v1030
        %v1034 = vshrl.u32 2475754826, %v1031
        %v1035 = vor.u32 %v1033, %v1034
        %v1036 = vshll.u32 2475754826, %v1030
        %v1037 = vshrl.u32 2131351028, %v1031
        %v1038 = vor.u32 %v1036, %v1037
        %v1039 = vshll.u32 2131351028, %v1030
        %v1040 = vshrl.u32 2102212464, %v1031
        %v1041 = vor.u32 %v1039, %v1040
        %v1042 = vshll.u32 2102212464, %v1030
        %v1043 = vshrl.u32 920167782, %v1031
        %v1044 = vor.u32 %v1042, %v1043
        %v1045 = vshll.u32 920167782, %v1030
        %v1046 = vshrl.u32 1326507024, %v1031
        %v1047 = vor.u32 %v1045, %v1046
        %vm1048 = vcmp.lt.s32.totalorder %v1029, 1
        %vm1049 = vcmp.lt.s32.totalorder %v1029, 2
        %vm1050 = vcmp.lt.s32.totalorder %v1029, 3
        %vm1051 = vcmp.lt.s32.totalorder %v1029, 4
        %v1052 = vsel %vm1048, %v1032, %v1035
        %v1053 = vsel %vm1051, %v1041, 2102212464
        %v1054 = vsel %vm1050, %v1038, %v1053
        %v1055 = vsel %vm1049, %v1052, %v1054
        %v1056 = vsel %vm1048, %v1035, %v1038
        %v1057 = vsel %vm1051, %v1044, 920167782
        %v1058 = vsel %vm1050, %v1041, %v1057
        %v1059 = vsel %vm1049, %v1056, %v1058
        %v1060 = vsel %vm1048, %v1038, %v1041
        %v1061 = vsel %vm1051, %v1047, 1326507024
        %v1062 = vsel %vm1050, %v1044, %v1061
        %v1063 = vsel %vm1049, %v1060, %v1062
        %v1064 = vshll.u32 %v1024, 8
        %v1065 = vmul.u32.u64.compose %v1064, %v1063
        %v1066 = vextract.low.u32 %v1065
        %v1067 = vextract.high.u32 %v1065
        %v1068 = vmul.u32.u64.compose %v1064, %v1059
        %v1069 = vextract.low.u32 %v1068
        %v1070 = vextract.high.u32 %v1068
        %v1071 = vmul.u32 %v1064, %v1055
        %v1072 = vadd.s32 %v1067, %v1069
        %vm1073 = vc.u32 %v1067, %v1069
        %v1074 = vadd.s32 %v1070, 1
        %v1075 = vsel %vm1073, %v1074, %v1070
        %v1076 = vadd.s32 %v1071, %v1075
        %v1077 = vadd.s32 %v1076, 536870912
        %v1078 = vshrl.u32 %v1077, 30
        %v1079 = vshll.u32 %v1078, 30
        %v1080 = vsub.s32 %v1076, %v1079
        %vm1081 = vcmp.lt.s32.totalorder %v1080, 0
        %v1082 = vsub.s32 0, %v1080
        %v1083 = vsel %vm1081, %v1082, %v1080
        %v1084 = vclz %v1083
        %v1085 = vsub.s32 %v1084, 2
        %vm1086 = vcmp.gt.s32.totalorder 0, %v1085
        %v1087 = vsel %vm1086, 0, %v1085
        %v1088 = vsub.s32 32, %v1087
        %v1089 = vshll.u32 %v1080, %v1087
        %v1090 = vshrl.u32 %v1072, %v1088
        %v1091 = vor.u32 %v1089, %v1090
        %v1092 = vsub.s32 4294967266, %v1087
        %v1093 = vadd.s32 %v1092, 127
        %v1094 = vshll.u32 %v1093, 23
        %v1095 = vor.u32 4788187, %v1094
        %v1096 = vand.u32 2147483647, %v1095
        %v1098 = vcvt.s32.f32 %v1091
        %v1099 = vmul.f32 %v1098, %v1096
        %v1100 = vxor.u32 %v1099, 2147483648
        %v1101 = vsel %vm1018, %v1100, %v1099
        %v1102 = vsub.s32 4, %v1078
        %v1103 = vsel %vm1018, %v1102, %v1078
        %v1104 = vsel %vm1017, %v912, %v1101
        %v1105 = vsel %vm1017, 0, %v1103
        %v1106 = vcosq.f32.pop %v1104
        %v1107 = vsinq.f32.pop %v1104
        %vm1108 = vweird.f32 %v912
        %v1109 = vand.u32 %v1105, 3
        %vm1110 = vcmp.lt.s32.totalorder %v1109, 2
        %vm1111 = vcmp.eq.s32.totalorder %v1109, 0
        %v1112 = vxor.u32 %v1107, 2147483648
        %v1113 = vsel %vm1111, %v1106, %v1112
        %vm1114 = vcmp.eq.s32.totalorder %v1109, 2
        %v1115 = vxor.u32 %v1106, 2147483648
        %v1116 = vsel %vm1114, %v1115, %v1107
        %v1117 = vsel %vm1110, %v1113, %v1116
        %v1118 = vsel %vm1108, nan, %v1117
        %v1119 = vmul.f32 %v909, %v1015
        %v1120 = vmul.f32 %v910, %v1118
        %1121 = vst [vmem:[%s359] sm:$0xff] %v1119
        %1122 = vst [vmem:[%s359 + $0x8] sm:$0xff] %v1120
        %v1123 = vand.u32 2147483647, %v911
        %vm1124 = vcmp.le.f32.partialorder %v1123, 0.7853982
        %vm1125 = vcmp.lt.s32.totalorder %v911, 0
        %v1126 = vand.u32 %v911, 2139095040
        %v1127 = vshrl.u32 %v1126, 23
        %v1128 = vsub.s32 %v1127, 127
        %v1129 = vand.u32 2147483647, %v911
        %v1130 = vand.u32 %v1129, 8388607
        %v1131 = vor.u32 %v1130, 8388608
        %v1132 = vsub.s32 0, %v1131
        %v1133 = vadd.s32 %v1128, 1
        %vm1134 = vcmp.gt.s32.totalorder %v1133, 0
        %v1135 = vsel %vm1134, %v1133, 0
        %v1136 = vshrl.u32 %v1135, 5
        %v1137 = vand.u32 %v1135, 31
        %v1138 = vsub.s32 32, %v1137
        %v1139 = vshrl.u32 683565275, %v1138
        %v1140 = vshll.u32 683565275, %v1137
        %v1141 = vshrl.u32 2475754826, %v1138
        %v1142 = vor.u32 %v1140, %v1141
        %v1143 = vshll.u32 2475754826, %v1137
        %v1144 = vshrl.u32 2131351028, %v1138
        %v1145 = vor.u32 %v1143, %v1144
        %v1146 = vshll.u32 2131351028, %v1137
        %v1147 = vshrl.u32 2102212464, %v1138
        %v1148 = vor.u32 %v1146, %v1147
        %v1149 = vshll.u32 2102212464, %v1137
        %v1150 = vshrl.u32 920167782, %v1138
        %v1151 = vor.u32 %v1149, %v1150
        %v1152 = vshll.u32 920167782, %v1137
        %v1153 = vshrl.u32 1326507024, %v1138
        %v1154 = vor.u32 %v1152, %v1153
        %vm1155 = vcmp.lt.s32.totalorder %v1136, 1
        %vm1156 = vcmp.lt.s32.totalorder %v1136, 2
        %vm1157 = vcmp.lt.s32.totalorder %v1136, 3
        %vm1158 = vcmp.lt.s32.totalorder %v1136, 4
        %v1159 = vsel %vm1155, %v1139, %v1142
        %v1160 = vsel %vm1158, %v1148, 2102212464
        %v1161 = vsel %vm1157, %v1145, %v1160
        %v1162 = vsel %vm1156, %v1159, %v1161
        %v1163 = vsel %vm1155, %v1142, %v1145
        %v1164 = vsel %vm1158, %v1151, 920167782
        %v1165 = vsel %vm1157, %v1148, %v1164
        %v1166 = vsel %vm1156, %v1163, %v1165
        %v1167 = vsel %vm1155, %v1145, %v1148
        %v1168 = vsel %vm1158, %v1154, 1326507024
        %v1169 = vsel %vm1157, %v1151, %v1168
        %v1170 = vsel %vm1156, %v1167, %v1169
        %v1171 = vshll.u32 %v1131, 8
        %v1172 = vmul.u32.u64.compose %v1171, %v1170
        %v1173 = vextract.low.u32 %v1172
        %v1174 = vextract.high.u32 %v1172
        %v1175 = vmul.u32.u64.compose %v1171, %v1166
        %v1176 = vextract.low.u32 %v1175
        %v1177 = vextract.high.u32 %v1175
        %v1178 = vmul.u32 %v1171, %v1162
        %v1179 = vadd.s32 %v1174, %v1176
        %vm1180 = vc.u32 %v1174, %v1176
        %v1181 = vadd.s32 %v1177, 1
        %v1182 = vsel %vm1180, %v1181, %v1177
        %v1183 = vadd.s32 %v1178, %v1182
        %v1184 = vadd.s32 %v1183, 536870912
        %v1185 = vshrl.u32 %v1184, 30
        %v1186 = vshll.u32 %v1185, 30
        %v1187 = vsub.s32 %v1183, %v1186
        %vm1188 = vcmp.lt.s32.totalorder %v1187, 0
        %v1189 = vsub.s32 0, %v1187
        %v1190 = vsel %vm1188, %v1189, %v1187
        %v1191 = vclz %v1190
        %v1192 = vsub.s32 %v1191, 2
        %vm1193 = vcmp.gt.s32.totalorder 0, %v1192
        %v1194 = vsel %vm1193, 0, %v1192
        %v1195 = vsub.s32 32, %v1194
        %v1196 = vshll.u32 %v1187, %v1194
        %v1197 = vshrl.u32 %v1179, %v1195
        %v1198 = vor.u32 %v1196, %v1197
        %v1199 = vsub.s32 4294967266, %v1194
        %v1200 = vadd.s32 %v1199, 127
        %v1201 = vshll.u32 %v1200, 23
        %v1202 = vor.u32 4788187, %v1201
        %v1203 = vand.u32 2147483647, %v1202
        %v1205 = vcvt.s32.f32 %v1198
        %v1206 = vmul.f32 %v1205, %v1203
        %v1207 = vxor.u32 %v1206, 2147483648
        %v1208 = vsel %vm1125, %v1207, %v1206
        %v1209 = vsub.s32 4, %v1185
        %v1210 = vsel %vm1125, %v1209, %v1185
        %v1211 = vsel %vm1124, %v911, %v1208
        %v1212 = vsel %vm1124, 0, %v1210
        %v1213 = vcosq.f32.pop %v1211
        %v1214 = vsinq.f32.pop %v1211
        %vm1215 = vweird.f32 %v911
        %v1216 = vadd.s32 %v1212, 3
        %v1217 = vand.u32 %v1216, 3
        %vm1218 = vcmp.lt.s32.totalorder %v1217, 2
        %vm1219 = vcmp.eq.s32.totalorder %v1217, 0
        %v1220 = vxor.u32 %v1214, 2147483648
        %v1221 = vsel %vm1219, %v1213, %v1220
        %vm1222 = vcmp.eq.s32.totalorder %v1217, 2
        %v1223 = vxor.u32 %v1213, 2147483648
        %v1224 = vsel %vm1222, %v1223, %v1214
        %v1225 = vsel %vm1218, %v1221, %v1224
        %v1226 = vsel %vm1215, nan, %v1225
        %v1227 = vand.u32 2147483647, %v912
        %vm1228 = vcmp.le.f32.partialorder %v1227, 0.7853982
        %vm1229 = vcmp.lt.s32.totalorder %v912, 0
        %v1230 = vand.u32 %v912, 2139095040
        %v1231 = vshrl.u32 %v1230, 23
        %v1232 = vsub.s32 %v1231, 127
        %v1233 = vand.u32 2147483647, %v912
        %v1234 = vand.u32 %v1233, 8388607
        %v1235 = vor.u32 %v1234, 8388608
        %v1236 = vsub.s32 0, %v1235
        %v1237 = vadd.s32 %v1232, 1
        %vm1238 = vcmp.gt.s32.totalorder %v1237, 0
        %v1239 = vsel %vm1238, %v1237, 0
        %v1240 = vshrl.u32 %v1239, 5
        %v1241 = vand.u32 %v1239, 31
        %v1242 = vsub.s32 32, %v1241
        %v1243 = vshrl.u32 683565275, %v1242
        %v1244 = vshll.u32 683565275, %v1241
        %v1245 = vshrl.u32 2475754826, %v1242
        %v1246 = vor.u32 %v1244, %v1245
        %v1247 = vshll.u32 2475754826, %v1241
        %v1248 = vshrl.u32 2131351028, %v1242
        %v1249 = vor.u32 %v1247, %v1248
        %v1250 = vshll.u32 2131351028, %v1241
        %v1251 = vshrl.u32 2102212464, %v1242
        %v1252 = vor.u32 %v1250, %v1251
        %v1253 = vshll.u32 2102212464, %v1241
        %v1254 = vshrl.u32 920167782, %v1242
        %v1255 = vor.u32 %v1253, %v1254
        %v1256 = vshll.u32 920167782, %v1241
        %v1257 = vshrl.u32 1326507024, %v1242
        %v1258 = vor.u32 %v1256, %v1257
        %vm1259 = vcmp.lt.s32.totalorder %v1240, 1
        %vm1260 = vcmp.lt.s32.totalorder %v1240, 2
        %vm1261 = vcmp.lt.s32.totalorder %v1240, 3
        %vm1262 = vcmp.lt.s32.totalorder %v1240, 4
        %v1263 = vsel %vm1259, %v1243, %v1246
        %v1264 = vsel %vm1262, %v1252, 2102212464
        %v1265 = vsel %vm1261, %v1249, %v1264
        %v1266 = vsel %vm1260, %v1263, %v1265
        %v1267 = vsel %vm1259, %v1246, %v1249
        %v1268 = vsel %vm1262, %v1255, 920167782
        %v1269 = vsel %vm1261, %v1252, %v1268
        %v1270 = vsel %vm1260, %v1267, %v1269
        %v1271 = vsel %vm1259, %v1249, %v1252
        %v1272 = vsel %vm1262, %v1258, 1326507024
        %v1273 = vsel %vm1261, %v1255, %v1272
        %v1274 = vsel %vm1260, %v1271, %v1273
        %v1275 = vshll.u32 %v1235, 8
        %v1276 = vmul.u32.u64.compose %v1275, %v1274
        %v1277 = vextract.low.u32 %v1276
        %v1278 = vextract.high.u32 %v1276
        %v1279 = vmul.u32.u64.compose %v1275, %v1270
        %v1280 = vextract.low.u32 %v1279
        %v1281 = vextract.high.u32 %v1279
        %v1282 = vmul.u32 %v1275, %v1266
        %v1283 = vadd.s32 %v1278, %v1280
        %vm1284 = vc.u32 %v1278, %v1280
        %v1285 = vadd.s32 %v1281, 1
        %v1286 = vsel %vm1284, %v1285, %v1281
        %v1287 = vadd.s32 %v1282, %v1286
        %v1288 = vadd.s32 %v1287, 536870912
        %v1289 = vshrl.u32 %v1288, 30
        %v1290 = vshll.u32 %v1289, 30
        %v1291 = vsub.s32 %v1287, %v1290
        %vm1292 = vcmp.lt.s32.totalorder %v1291, 0
        %v1293 = vsub.s32 0, %v1291
        %v1294 = vsel %vm1292, %v1293, %v1291
        %v1295 = vclz %v1294
        %v1296 = vsub.s32 %v1295, 2
        %vm1297 = vcmp.gt.s32.totalorder 0, %v1296
        %v1298 = vsel %vm1297, 0, %v1296
        %v1299 = vsub.s32 32, %v1298
        %v1300 = vshll.u32 %v1291, %v1298
        %v1301 = vshrl.u32 %v1283, %v1299
        %v1302 = vor.u32 %v1300, %v1301
        %v1303 = vsub.s32 4294967266, %v1298
        %v1304 = vadd.s32 %v1303, 127
        %v1305 = vshll.u32 %v1304, 23
        %v1306 = vor.u32 4788187, %v1305
        %v1307 = vand.u32 2147483647, %v1306
        %v1309 = vcvt.s32.f32 %v1302
        %v1310 = vmul.f32 %v1309, %v1307
        %v1311 = vxor.u32 %v1310, 2147483648
        %v1312 = vsel %vm1229, %v1311, %v1310
        %v1313 = vsub.s32 4, %v1289
        %v1314 = vsel %vm1229, %v1313, %v1289
        %v1315 = vsel %vm1228, %v912, %v1312
        %v1316 = vsel %vm1228, 0, %v1314
        %v1317 = vcosq.f32.pop %v1315
        %v1318 = vsinq.f32.pop %v1315
        %vm1319 = vweird.f32 %v912
        %v1320 = vadd.s32 %v1316, 3
        %v1321 = vand.u32 %v1320, 3
        %vm1322 = vcmp.lt.s32.totalorder %v1321, 2
        %vm1323 = vcmp.eq.s32.totalorder %v1321, 0
        %v1324 = vxor.u32 %v1318, 2147483648
        %v1325 = vsel %vm1323, %v1317, %v1324
        %vm1326 = vcmp.eq.s32.totalorder %v1321, 2
        %v1327 = vxor.u32 %v1317, 2147483648
        %v1328 = vsel %vm1326, %v1327, %v1318
        %v1329 = vsel %vm1322, %v1325, %v1328
        %v1330 = vsel %vm1319, nan, %v1329
        %v1331 = vmul.f32 %v909, %v1226
        %v1332 = vmul.f32 %v910, %v1330
        %1333 = vst [vmem:[%s366] sm:$0xff] %v1331
        %1334 = vst [vmem:[%s366 + $0x8] sm:$0xff] %v1332
        %s1335 = sand.u32 %s214, 1
        %s1336 = scalar_lea.sflag [#allocation4], %s1335
        %s1337 = sand.u32 %s214, 1
        %s1338 = smul.addr %s1337, 16
        %s1339 = scalar_lea.vmem [#allocation5], %s1338
        %s1340 = sand.u32 %s240, 1
        %s1341 = scalar_lea.sflag [#allocation7], %s1340
        %s1342 = sand.u32 %s240, 1
        %s1343 = smul.addr %s1342, 16
        %s1344 = scalar_lea.vmem [#allocation6], %s1343
        // Predicated region
        $region57: #{tpu_custom_call.1} parent=51 // pred_check
          %p1345 = pneg %p224
        $region58: #{tpu_custom_call.1} parent=51 // pred_check_branch
          %1347 = sbr.rel (%p1345) target = $region60
        $region59: #{tpu_custom_call.1} parent=51 // pred_region
          %s1349 = ssub.s32 256, 256
          %1350 = vsyncadd %s1336, %s1349
          %s1351 = smul.addr %s28, 2
          %s1352 = smul.addr %s1351, 128
          %s1353 = scalar_lea.hbm %s8, %s1352
          %s1355 = sshll.u32 %s1339, 4
          %s1356 = int_to_ptr.vmem [resolvable:$true] %s1355
          %1358 = dma.vmem_to_hbm [thread:$0]  %s1356, 256, %s1353, %s1336
        $region60: #{tpu_custom_call.1} parent=51 // pred_fallthru
          _
        // Predicated region
        $region61: #{tpu_custom_call.1} parent=51 // pred_check
          %p1359 = pneg %p250
        $region62: #{tpu_custom_call.1} parent=51 // pred_check_branch
          %1361 = sbr.rel (%p1359) target = $region64
        $region63: #{tpu_custom_call.1} parent=51 // pred_region
          %s1363 = ssub.s32 256, 256
          %1364 = vsyncadd %s1341, %s1363
          %s1365 = smul.addr %s28, 2
          %s1366 = smul.addr %s1365, 128
          %s1367 = scalar_lea.hbm %s9, %s1366
          %s1369 = sshll.u32 %s1344, 4
          %s1370 = int_to_ptr.vmem [resolvable:$true] %s1369
          %1372 = dma.vmem_to_hbm [thread:$0]  %s1370, 256, %s1367, %s1341
        $region64: #{tpu_custom_call.1} parent=51 // pred_fallthru
          _
      $region52: #{tpu_custom_call.1} parent=5 // pred_fallthru
        _
      %p1373 = scmp.le.s32.totalorder 2, %s23
      // Predicated region
      $region65: #{tpu_custom_call.1} parent=5 // pred_check
        %p1374 = pneg %p1373
      $region66: #{tpu_custom_call.1} parent=5 // pred_check_branch
        %1376 = sbr.rel (%p1374) target = $region68
      $region67: #{tpu_custom_call.1} parent=5 // pred_region
        %s1377 = ssub.s32 %s23, 2
        // Predicated region
        $region69: #{tpu_custom_call.1} parent=67 // pred_check
          %p1378 = pneg %p230
        $region70: #{tpu_custom_call.1} parent=67 // pred_check_branch
          %1380 = sbr.rel (%p1378) target = $region72
        $region71: #{tpu_custom_call.1} parent=67 // pred_region
          %s1381 = sand.u32 %s215, 1
          %s1382 = scalar_lea.sflag [#allocation4], %s1381
          %s1383 = sand.u32 %s215, 1
          %s1384 = smul.addr %s1383, 16
          %s1385 = scalar_lea.vmem [#allocation5], %s1384
          %1386 = dma.done %s1382, 256
        $region72: #{tpu_custom_call.1} parent=67 // pred_fallthru
          _
        // Predicated region
        $region73: #{tpu_custom_call.1} parent=67 // pred_check
          %p1387 = pneg %p256
        $region74: #{tpu_custom_call.1} parent=67 // pred_check_branch
          %1389 = sbr.rel (%p1387) target = $region76
        $region75: #{tpu_custom_call.1} parent=67 // pred_region
          %s1390 = sand.u32 %s241, 1
          %s1391 = scalar_lea.sflag [#allocation7], %s1390
          %s1392 = sand.u32 %s241, 1
          %s1393 = smul.addr %s1392, 16
          %s1394 = scalar_lea.vmem [#allocation6], %s1393
          %1395 = dma.done %s1391, 256
        $region76: #{tpu_custom_call.1} parent=67 // pred_fallthru
          _
      $region68: #{tpu_custom_call.1} parent=5 // pred_fallthru
        _
    $region6: #{tpu_custom_call.1} parent=1 // loop_footer
      %s27 = sadd.s32 1, %s23
    $region7: #{tpu_custom_call.1} parent=1 // loop_footer_branch
      %22 = sbr.rel target = $region3
    $region8: #{tpu_custom_call.1} parent=1 // loop_exit
      _
    %1396 = vsyncpa [#allocation3], 1
    %s1397 = scalar_lea.sflag [#allocation3], 1
    %1398 = vsyncpa %s1397, 1
    %1399 = vsyncpa [#allocation4], 1
    %s1400 = scalar_lea.sflag [#allocation4], 1
    %1401 = vsyncpa %s1400, 1
    %1402 = vsyncpa [#allocation7], 1
    %s1403 = scalar_lea.sflag [#allocation7], 1
    %1404 = vsyncpa %s1403, 1

</llo_original>
